<compile_context>
chip_gen: v5e
topology: v5e:2x2
jax: 0.10.0
libtpu: 0.0.40
codegen_flags: <defaults>
</compile_context>

<pallas_src>
import functools

import numpy as np

import jax
import jax.numpy as jnp
from jax.experimental import pallas as pl
from jax.experimental.pallas import tpu as pltpu


# ------------------------------ fused kernel ------------------------------

def _fused_vgg_kernel(xg1_ref, w1_ref, b1_ref, sel1_ref, w2_ref, b2_ref,
                      avg_ref, fcw_ref, fcb_ref, out_ref,
                      a1_ref, xg2_ref, a2_ref,
                      *, wp1, g1, m1, wp2, g2, m2, n_img, n_avg):
    """Whole FeatureExtractor forward in one kernel.

    Activations are 2D (channels, flattened padded spatial) with the spatial
    axis on lanes.  3x3 SAME convs = 9 shifted GEMMs over a zero-guarded
    buffer; 2x2 max-pools = elementwise max of 4 lane-shifted views followed
    by a 0/1 selection matmul that also re-embeds into the next padded layout;
    the adaptive avg-pool + flatten + fc are an averaging-selection matmul
    plus small GEMMs producing the transposed (out_features, N) result.
    """
    f32 = jnp.float32
    bf16 = jnp.bfloat16
    c1 = w1_ref.shape[1]          # conv1 out channels
    c2 = w2_ref.shape[1]          # conv2 out channels

    # ---------------- conv1 (3x3, SAME) + bias + ReLU ----------------
    acc1 = jnp.zeros((c1, m1), f32)
    for kh in range(3):
        for kw in range(3):
            d = (kh - 1) * wp1 + (kw - 1)
            s = xg1_ref[:, g1 + d:g1 + d + m1].astype(bf16)     # shifted view
            acc1 = acc1 + jnp.dot(w1_ref[kh * 3 + kw], s,
                                  preferred_element_type=f32)
    a1_ref[...] = jnp.maximum(acc1 + b1_ref[...], 0.0)          # f32 epilogue

    # ------- maxpool1 (2x2/2): shifted max + selection matmul placement -----
    l1 = m1 - (wp1 + 1)
    f1 = jnp.maximum(
        jnp.maximum(a1_ref[:, 0:l1], a1_ref[:, 1:l1 + 1]),
        jnp.maximum(a1_ref[:, wp1:wp1 + l1], a1_ref[:, wp1 + 1:wp1 + 1 + l1]))
    # subsample valid window anchors and scatter into conv2's padded layout;
    # the 0/1 selection is exact in bf16, so store the result directly as bf16.
    xg2_ref[...] = jnp.dot(f1.astype(bf16), sel1_ref[...],
                           preferred_element_type=f32).astype(bf16)

    # ---------------- conv2 (3x3, SAME) + bias + ReLU ----------------
    acc2 = jnp.zeros((c2, m2), f32)
    for kh in range(3):
        for kw in range(3):
            d = (kh - 1) * wp2 + (kw - 1)
            s = xg2_ref[:, g2 + d:g2 + d + m2]                  # already bf16
            acc2 = acc2 + jnp.dot(w2_ref[kh * 3 + kw], s,
                                  preferred_element_type=f32)
    a2_ref[...] = jnp.maximum(acc2 + b2_ref[...], 0.0)

    # ---- maxpool2 + adaptive avg pool + flatten + fc (transposed output) ----
    l2 = m2 - (wp2 + 1)
    f2 = jnp.maximum(
        jnp.maximum(a2_ref[:, 0:l2], a2_ref[:, 1:l2 + 1]),
        jnp.maximum(a2_ref[:, wp2:wp2 + l2], a2_ref[:, wp2 + 1:wp2 + 1 + l2]))
    f2b = f2.astype(bf16)
    res = fcb_ref[...]                                          # (out_f, 1)
    for si in range(n_avg):
        # per avg-window (i,j): averaging-selection matmul -> (c2, N) features
        g_s = jnp.dot(f2b, avg_ref[:, si * n_img:(si + 1) * n_img],
                      preferred_element_type=f32)
        # fc contribution of those features (weights pre-regrouped per window)
        res = res + jnp.dot(fcw_ref[si], g_s, preferred_element_type=f32)
    out_ref[...] = res.astype(out_ref.dtype)                    # (out_f, N)


# --------------------------- wrapper / weight pack ---------------------------

def make_feature_extractor(params, x_shape):
    """Pre-packs weights / selection matrices once and returns a jitted fwd."""
    N, Cin, H, W = x_shape
    C1, cin_w, KH, KW = params["conv1_w"].shape
    C2 = params["conv2_w"].shape[0]
    OUTF, FIN = params["fc_w"].shape
    assert cin_w == Cin and KH == 3 and KW == 3
    assert H % 8 == 0 and W % 8 == 0        # two 2x2 pools + adaptive (2,2)

    # geometry (flattened, zero-padded + guarded layouts)
    Hp1, Wp1 = H + 2, W + 2
    M1, G1 = N * Hp1 * Wp1, Wp1 + 1
    H2, W2 = H // 2, W // 2
    Hp2, Wp2 = H2 + 2, W2 + 2
    M2, G2 = N * Hp2 * Wp2, Wp2 + 1
    H3, W3 = H2 // 2, W2 // 2
    OH = OW = 2                              # AdaptiveAvgPool2d((2, 2))
    # TODO(synk): only the divisible case of AdaptiveAvgPool2d is implemented.
    kh3, kw3 = H3 // OH, W3 // OW
    L1 = M1 - (Wp1 + 1)
    L2 = M2 - (Wp2 + 1)
    navg = OH * OW
    assert FIN == C2 * navg
    CinP = ((Cin + 7) // 8) * 8              # pad input channels to sublanes

    # conv weights -> per-tap (kh*3+kw, Cout, Cin) stacks, bf16 for the MXU
    w1 = np.zeros((C1, CinP, 3, 3), np.float32)
    w1[:, :Cin] = np.asarray(params["conv1_w"], np.float32)
    w1_taps = jnp.asarray(w1.transpose(2, 3, 0, 1).reshape(9, C1, CinP),
                          jnp.bfloat16)
    b1 = jnp.asarray(np.asarray(params["conv1_b"], np.float32).reshape(C1, 1))
    w2 = np.asarray(params["conv2_w"], np.float32)
    w2_taps = jnp.asarray(w2.transpose(2, 3, 0, 1).reshape(9, C2, C1),
                          jnp.bfloat16)
    b2 = jnp.asarray(np.asarray(params["conv2_b"], np.float32).reshape(C2, 1))

    # maxpool1: 0/1 matrix that picks window anchors of the shifted-max map and
    # places them (zero-padded) into conv2's guarded flattened layout.
    sel1 = np.zeros((L1, M2 + 2 * G2), np.float32)
    for n in range(N):
        for oh in range(H2):
            for ow in range(W2):
                p = n * Hp1 * Wp1 + (2 * oh + 1) * Wp1 + (2 * ow + 1)
                q = G2 + n * Hp2 * Wp2 + (oh + 1) * Wp2 + (ow + 1)
                sel1[p, q] = 1.0
    sel1 = jnp.asarray(sel1, jnp.bfloat16)    # 0/1 entries: exact in bf16

    # maxpool2 subsample + adaptive avg pool folded into one matrix,
    # columns ordered (avg-window s, image n).  Scale 1/(kh3*kw3) is a power
    # of two here, so bf16 is exact.
    avgm = np.zeros((L2, navg * N), np.float32)
    scale = 1.0 / (kh3 * kw3)
    for n in range(N):
        for oh in range(H3):
            for ow in range(W3):
                p = n * Hp2 * Wp2 + (2 * oh + 1) * Wp2 + (2 * ow + 1)
                s = (oh // kh3) * OW + (ow // kw3)
                avgm[p, s * N + n] += scale
    avgm = jnp.asarray(avgm, jnp.bfloat16)

    # fc weight pre-packed (no per-call transpose): fcw_s[s][o, c] = W[o, c*navg+s]
    fcw = np.asarray(params["fc_w"], np.float32).reshape(OUTF, C2, navg)
    fcw_s = jnp.asarray(fcw.transpose(2, 0, 1))                 # (navg, OUTF, C2)
    fcb = jnp.asarray(np.asarray(params["fc_b"], np.float32).reshape(OUTF, 1))

    kernel = functools.partial(
        _fused_vgg_kernel,
        wp1=Wp1, g1=G1, m1=M1, wp2=Wp2, g2=G2, m2=M2, n_img=N, n_avg=navg)

    vmem_spec = pl.BlockSpec(memory_space=pltpu.MemorySpace.VMEM)
    fused_call = pl.pallas_call(
        kernel,
        out_shape=jax.ShapeDtypeStruct((OUTF, N), jnp.float32),
        in_specs=[vmem_spec] * 9,
        out_specs=vmem_spec,
        scratch_shapes=[
            pltpu.VMEM((C1, M1), jnp.float32),             # conv1 output
            pltpu.VMEM((C1, M2 + 2 * G2), jnp.bfloat16),   # conv2 padded input
            pltpu.VMEM((C2, M2), jnp.float32),             # conv2 output
        ],
    )

    @jax.jit
    def forward(x):
        # Pack the (tiny) input once: NCHW -> (CinP, N*Hp1*Wp1) with zero pad
        # ring + lane guards; everything else happens inside the fused kernel.
        xp = jnp.pad(x, ((0, 0), (0, CinP - Cin), (1, 1), (1, 1)))
        xg1 = xp.transpose(1, 0, 2, 3).reshape(CinP, M1)
        xg1 = jnp.pad(xg1, ((0, 0), (G1, G1)))
        y = fused_call(xg1, w1_taps, b1, sel1, w2_taps, b2, avgm, fcw_s, fcb)
        return y.T                                         # (N, out_features)

    return forward


# ----------------------------- pure-JAX reference -----------------------------

def reference_forward(params, x):
    def conv(x, w, b):
        y = jax.lax.conv_general_dilated(
            x, w, (1, 1), "SAME", dimension_numbers=("NCHW", "OIHW", "NCHW"))
        return jnp.maximum(y + b[None, :, None, None], 0.0)

    def mpool(x):
        return jax.lax.reduce_window(
            x, -jnp.inf, jax.lax.max, (1, 1, 2, 2), (1, 1, 2, 2), "VALID")

    out = conv(x, params["conv1_w"], params["conv1_b"])
    out = mpool(out)
    out = conv(out, params["conv2_w"], params["conv2_b"])
    out = mpool(out)
    N, C, H, W = out.shape
    out = out.reshape(N, C, 2, H // 2, 2, W // 2).mean(axis=(3, 5))
    out = out.reshape(N, -1)
    return out @ params["fc_w"].T + params["fc_b"]


# ----------------------------------- main -----------------------------------

if __name__ == "__main__":
    key = jax.random.PRNGKey(0)
    ks = jax.random.split(key, 7)

    # Small VGG-style backbone (deterministic synthetic weights).
    params = {
        "conv1_w": jax.random.normal(ks[0], (8, 3, 3, 3), jnp.float32)
                   * (1.0 / (3 * 3 * 3) ** 0.5),
        "conv1_b": jax.random.normal(ks[1], (8,), jnp.float32) * 0.01,
        "conv2_w": jax.random.normal(ks[2], (16, 8, 3, 3), jnp.float32)
                   * (1.0 / (8 * 3 * 3) ** 0.5),
        "conv2_b": jax.random.normal(ks[3], (16,), jnp.float32) * 0.01,
        "fc_w":    jax.random.normal(ks[4], (32, 64), jnp.float32)
                   * (1.0 / 64 ** 0.5),
        "fc_b":    jax.random.normal(ks[5], (32,), jnp.float32) * 0.01,
    }

    x = jax.random.normal(ks[6], (2, 3, 16, 16), jnp.float32)   # NCHW

    fwd = make_feature_extractor(params, x.shape)
    out = jax.block_until_ready(fwd(x))
    assert out.shape == (2, 32), out.shape

    ref = jax.block_until_ready(reference_forward(params, x))
    # bf16 MXU operands (f32 accumulation/epilogue) -> loosened tolerance.
    err = float(jnp.max(jnp.abs(out - ref)))
    assert jnp.allclose(out, ref, rtol=5e-2, atol=5e-2), err

    print("KERNEL_OK")
</pallas_src>

<mosaic_0001>
module attributes {stable_mosaic.version = 11 : i64} {
  func.func @_fused_vgg_kernel(%arg0: memref<8x686xf32, #tpu.memory_space<vmem>>, %arg1: memref<9x8x8xbf16, #tpu.memory_space<vmem>>, %arg2: memref<8x1xf32, #tpu.memory_space<vmem>>, %arg3: memref<629x222xbf16, #tpu.memory_space<vmem>>, %arg4: memref<9x16x8xbf16, #tpu.memory_space<vmem>>, %arg5: memref<16x1xf32, #tpu.memory_space<vmem>>, %arg6: memref<189x8xbf16, #tpu.memory_space<vmem>>, %arg7: memref<4x32x16xf32, #tpu.memory_space<vmem>>, %arg8: memref<32x1xf32, #tpu.memory_space<vmem>>, %arg9: memref<32x2xf32, #tpu.memory_space<vmem>>, %arg10: memref<8x648xf32, #tpu.memory_space<vmem>>, %arg11: memref<8x222xbf16, #tpu.memory_space<vmem>>, %arg12: memref<16x200xf32, #tpu.memory_space<vmem>>) attributes {dimension_semantics = [], scalar_prefetch = 0 : i64, scratch_operands = 3 : i64, tpu.core_type = #tpu.core_type<tc>} {
    %cst = arith.constant 0.000000e+00 : f32
    %0 = vector.broadcast %cst : f32 to vector<8x648xf32>
    %c0 = arith.constant 0 : index
    %c0_0 = arith.constant 0 : index
    %1 = vector.load %arg0[%c0, %c0_0] : memref<8x686xf32, #tpu.memory_space<vmem>>, vector<8x648xf32>
    %2 = arith.truncf %1 : vector<8x648xf32> to vector<8x648xbf16>
    %c0_1 = arith.constant 0 : index
    %c0_2 = arith.constant 0 : index
    %c0_3 = arith.constant 0 : index
    %3 = vector.load %arg1[%c0_1, %c0_2, %c0_3] : memref<9x8x8xbf16, #tpu.memory_space<vmem>>, vector<1x8x8xbf16>
    %4 = vector.shape_cast %3 : vector<1x8x8xbf16> to vector<8x8xbf16>
    %cst_4 = arith.constant dense<0.000000e+00> : vector<8x648xf32>
    %5 = tpu.matmul %4, %2, %cst_4 {dimension_numbers = #tpu.dot_dimension_numbers<[1], [0], [0], [1], [0, 0, 1, 1], [], []>} : vector<8x8xbf16>, vector<8x648xbf16>, vector<8x648xf32> -> vector<8x648xf32>
    %6 = arith.addf %0, %5 : vector<8x648xf32>
    %c0_5 = arith.constant 0 : index
    %c1 = arith.constant 1 : index
    %7 = vector.load %arg0[%c0_5, %c1] : memref<8x686xf32, #tpu.memory_space<vmem>>, vector<8x648xf32>
    %8 = arith.truncf %7 : vector<8x648xf32> to vector<8x648xbf16>
    %c1_6 = arith.constant 1 : index
    %c0_7 = arith.constant 0 : index
    %c0_8 = arith.constant 0 : index
    %9 = vector.load %arg1[%c1_6, %c0_7, %c0_8] : memref<9x8x8xbf16, #tpu.memory_space<vmem>>, vector<1x8x8xbf16>
    %10 = vector.shape_cast %9 : vector<1x8x8xbf16> to vector<8x8xbf16>
    %cst_9 = arith.constant dense<0.000000e+00> : vector<8x648xf32>
    %11 = tpu.matmul %10, %8, %cst_9 {dimension_numbers = #tpu.dot_dimension_numbers<[1], [0], [0], [1], [0, 0, 1, 1], [], []>} : vector<8x8xbf16>, vector<8x648xbf16>, vector<8x648xf32> -> vector<8x648xf32>
    %12 = arith.addf %6, %11 : vector<8x648xf32>
    %c0_10 = arith.constant 0 : index
    %c2 = arith.constant 2 : index
    %13 = vector.load %arg0[%c0_10, %c2] : memref<8x686xf32, #tpu.memory_space<vmem>>, vector<8x648xf32>
    %14 = arith.truncf %13 : vector<8x648xf32> to vector<8x648xbf16>
    %c2_11 = arith.constant 2 : index
    %c0_12 = arith.constant 0 : index
    %c0_13 = arith.constant 0 : index
    %15 = vector.load %arg1[%c2_11, %c0_12, %c0_13] : memref<9x8x8xbf16, #tpu.memory_space<vmem>>, vector<1x8x8xbf16>
    %16 = vector.shape_cast %15 : vector<1x8x8xbf16> to vector<8x8xbf16>
    %cst_14 = arith.constant dense<0.000000e+00> : vector<8x648xf32>
    %17 = tpu.matmul %16, %14, %cst_14 {dimension_numbers = #tpu.dot_dimension_numbers<[1], [0], [0], [1], [0, 0, 1, 1], [], []>} : vector<8x8xbf16>, vector<8x648xbf16>, vector<8x648xf32> -> vector<8x648xf32>
    %18 = arith.addf %12, %17 : vector<8x648xf32>
    %c0_15 = arith.constant 0 : index
    %c18 = arith.constant 18 : index
    %19 = vector.load %arg0[%c0_15, %c18] : memref<8x686xf32, #tpu.memory_space<vmem>>, vector<8x648xf32>
    %20 = arith.truncf %19 : vector<8x648xf32> to vector<8x648xbf16>
    %c3 = arith.constant 3 : index
    %c0_16 = arith.constant 0 : index
    %c0_17 = arith.constant 0 : index
    %21 = vector.load %arg1[%c3, %c0_16, %c0_17] : memref<9x8x8xbf16, #tpu.memory_space<vmem>>, vector<1x8x8xbf16>
    %22 = vector.shape_cast %21 : vector<1x8x8xbf16> to vector<8x8xbf16>
    %cst_18 = arith.constant dense<0.000000e+00> : vector<8x648xf32>
    %23 = tpu.matmul %22, %20, %cst_18 {dimension_numbers = #tpu.dot_dimension_numbers<[1], [0], [0], [1], [0, 0, 1, 1], [], []>} : vector<8x8xbf16>, vector<8x648xbf16>, vector<8x648xf32> -> vector<8x648xf32>
    %24 = arith.addf %18, %23 : vector<8x648xf32>
    %c0_19 = arith.constant 0 : index
    %c19 = arith.constant 19 : index
    %25 = vector.load %arg0[%c0_19, %c19] : memref<8x686xf32, #tpu.memory_space<vmem>>, vector<8x648xf32>
    %26 = arith.truncf %25 : vector<8x648xf32> to vector<8x648xbf16>
    %c4 = arith.constant 4 : index
    %c0_20 = arith.constant 0 : index
    %c0_21 = arith.constant 0 : index
    %27 = vector.load %arg1[%c4, %c0_20, %c0_21] : memref<9x8x8xbf16, #tpu.memory_space<vmem>>, vector<1x8x8xbf16>
    %28 = vector.shape_cast %27 : vector<1x8x8xbf16> to vector<8x8xbf16>
    %cst_22 = arith.constant dense<0.000000e+00> : vector<8x648xf32>
    %29 = tpu.matmul %28, %26, %cst_22 {dimension_numbers = #tpu.dot_dimension_numbers<[1], [0], [0], [1], [0, 0, 1, 1], [], []>} : vector<8x8xbf16>, vector<8x648xbf16>, vector<8x648xf32> -> vector<8x648xf32>
    %30 = arith.addf %24, %29 : vector<8x648xf32>
    %c0_23 = arith.constant 0 : index
    %c20 = arith.constant 20 : index
    %31 = vector.load %arg0[%c0_23, %c20] : memref<8x686xf32, #tpu.memory_space<vmem>>, vector<8x648xf32>
    %32 = arith.truncf %31 : vector<8x648xf32> to vector<8x648xbf16>
    %c5 = arith.constant 5 : index
    %c0_24 = arith.constant 0 : index
    %c0_25 = arith.constant 0 : index
    %33 = vector.load %arg1[%c5, %c0_24, %c0_25] : memref<9x8x8xbf16, #tpu.memory_space<vmem>>, vector<1x8x8xbf16>
    %34 = vector.shape_cast %33 : vector<1x8x8xbf16> to vector<8x8xbf16>
    %cst_26 = arith.constant dense<0.000000e+00> : vector<8x648xf32>
    %35 = tpu.matmul %34, %32, %cst_26 {dimension_numbers = #tpu.dot_dimension_numbers<[1], [0], [0], [1], [0, 0, 1, 1], [], []>} : vector<8x8xbf16>, vector<8x648xbf16>, vector<8x648xf32> -> vector<8x648xf32>
    %36 = arith.addf %30, %35 : vector<8x648xf32>
    %c0_27 = arith.constant 0 : index
    %c36 = arith.constant 36 : index
    %37 = vector.load %arg0[%c0_27, %c36] : memref<8x686xf32, #tpu.memory_space<vmem>>, vector<8x648xf32>
    %38 = arith.truncf %37 : vector<8x648xf32> to vector<8x648xbf16>
    %c6 = arith.constant 6 : index
    %c0_28 = arith.constant 0 : index
    %c0_29 = arith.constant 0 : index
    %39 = vector.load %arg1[%c6, %c0_28, %c0_29] : memref<9x8x8xbf16, #tpu.memory_space<vmem>>, vector<1x8x8xbf16>
    %40 = vector.shape_cast %39 : vector<1x8x8xbf16> to vector<8x8xbf16>
    %cst_30 = arith.constant dense<0.000000e+00> : vector<8x648xf32>
    %41 = tpu.matmul %40, %38, %cst_30 {dimension_numbers = #tpu.dot_dimension_numbers<[1], [0], [0], [1], [0, 0, 1, 1], [], []>} : vector<8x8xbf16>, vector<8x648xbf16>, vector<8x648xf32> -> vector<8x648xf32>
    %42 = arith.addf %36, %41 : vector<8x648xf32>
    %c0_31 = arith.constant 0 : index
    %c37 = arith.constant 37 : index
    %43 = vector.load %arg0[%c0_31, %c37] : memref<8x686xf32, #tpu.memory_space<vmem>>, vector<8x648xf32>
    %44 = arith.truncf %43 : vector<8x648xf32> to vector<8x648xbf16>
    %c7 = arith.constant 7 : index
    %c0_32 = arith.constant 0 : index
    %c0_33 = arith.constant 0 : index
    %45 = vector.load %arg1[%c7, %c0_32, %c0_33] : memref<9x8x8xbf16, #tpu.memory_space<vmem>>, vector<1x8x8xbf16>
    %46 = vector.shape_cast %45 : vector<1x8x8xbf16> to vector<8x8xbf16>
    %cst_34 = arith.constant dense<0.000000e+00> : vector<8x648xf32>
    %47 = tpu.matmul %46, %44, %cst_34 {dimension_numbers = #tpu.dot_dimension_numbers<[1], [0], [0], [1], [0, 0, 1, 1], [], []>} : vector<8x8xbf16>, vector<8x648xbf16>, vector<8x648xf32> -> vector<8x648xf32>
    %48 = arith.addf %42, %47 : vector<8x648xf32>
    %c0_35 = arith.constant 0 : index
    %c38 = arith.constant 38 : index
    %49 = vector.load %arg0[%c0_35, %c38] : memref<8x686xf32, #tpu.memory_space<vmem>>, vector<8x648xf32>
    %50 = arith.truncf %49 : vector<8x648xf32> to vector<8x648xbf16>
    %c8 = arith.constant 8 : index
    %c0_36 = arith.constant 0 : index
    %c0_37 = arith.constant 0 : index
    %51 = vector.load %arg1[%c8, %c0_36, %c0_37] : memref<9x8x8xbf16, #tpu.memory_space<vmem>>, vector<1x8x8xbf16>
    %52 = vector.shape_cast %51 : vector<1x8x8xbf16> to vector<8x8xbf16>
    %cst_38 = arith.constant dense<0.000000e+00> : vector<8x648xf32>
    %53 = tpu.matmul %52, %50, %cst_38 {dimension_numbers = #tpu.dot_dimension_numbers<[1], [0], [0], [1], [0, 0, 1, 1], [], []>} : vector<8x8xbf16>, vector<8x648xbf16>, vector<8x648xf32> -> vector<8x648xf32>
    %54 = arith.addf %48, %53 : vector<8x648xf32>
    %c0_39 = arith.constant 0 : index
    %c0_40 = arith.constant 0 : index
    %55 = vector.load %arg2[%c0_39, %c0_40] : memref<8x1xf32, #tpu.memory_space<vmem>>, vector<8x1xf32>
    %56 = vector.broadcast %55 : vector<8x1xf32> to vector<8x648xf32>
    %57 = arith.addf %54, %56 : vector<8x648xf32>
    %cst_41 = arith.constant 0.000000e+00 : f32
    %58 = vector.broadcast %cst_41 : f32 to vector<8x648xf32>
    %59 = arith.maximumf %57, %58 : vector<8x648xf32>
    %c0_42 = arith.constant 0 : index
    %c0_43 = arith.constant 0 : index
    %60 = vector.load %arg10[%c0_42, %c0_43] : memref<8x648xf32, #tpu.memory_space<vmem>>, vector<8x648xf32>
    tpu.vector_store %arg10[%c0_42, %c0_43], %59 {strides = array<i32>} : memref<8x648xf32, #tpu.memory_space<vmem>>, vector<8x648xf32>,
    %c0_44 = arith.constant 0 : index
    %c0_45 = arith.constant 0 : index
    %61 = vector.load %arg10[%c0_44, %c0_45] : memref<8x648xf32, #tpu.memory_space<vmem>>, vector<8x629xf32>
    %c0_46 = arith.constant 0 : index
    %c1_47 = arith.constant 1 : index
    %62 = vector.load %arg10[%c0_46, %c1_47] : memref<8x648xf32, #tpu.memory_space<vmem>>, vector<8x629xf32>
    %63 = arith.maximumf %61, %62 : vector<8x629xf32>
    %c0_48 = arith.constant 0 : index
    %c18_49 = arith.constant 18 : index
    %64 = vector.load %arg10[%c0_48, %c18_49] : memref<8x648xf32, #tpu.memory_space<vmem>>, vector<8x629xf32>
    %c0_50 = arith.constant 0 : index
    %c19_51 = arith.constant 19 : index
    %65 = vector.load %arg10[%c0_50, %c19_51] : memref<8x648xf32, #tpu.memory_space<vmem>>, vector<8x629xf32>
    %66 = arith.maximumf %64, %65 : vector<8x629xf32>
    %67 = arith.maximumf %63, %66 : vector<8x629xf32>
    %68 = arith.truncf %67 : vector<8x629xf32> to vector<8x629xbf16>
    %c0_52 = arith.constant 0 : index
    %c0_53 = arith.constant 0 : index
    %69 = vector.load %arg3[%c0_52, %c0_53] : memref<629x222xbf16, #tpu.memory_space<vmem>>, vector<629x222xbf16>
    %cst_54 = arith.constant dense<0.000000e+00> : vector<8x222xf32>
    %70 = tpu.matmul %68, %69, %cst_54 {dimension_numbers = #tpu.dot_dimension_numbers<[1], [0], [0], [1], [0, 0, 1, 1], [], []>} : vector<8x629xbf16>, vector<629x222xbf16>, vector<8x222xf32> -> vector<8x222xf32>
    %71 = arith.truncf %70 : vector<8x222xf32> to vector<8x222xbf16>
    %c0_55 = arith.constant 0 : index
    %c0_56 = arith.constant 0 : index
    %72 = vector.load %arg11[%c0_55, %c0_56] : memref<8x222xbf16, #tpu.memory_space<vmem>>, vector<8x222xbf16>
    tpu.vector_store %arg11[%c0_55, %c0_56], %71 {strides = array<i32>} : memref<8x222xbf16, #tpu.memory_space<vmem>>, vector<8x222xbf16>,
    %cst_57 = arith.constant 0.000000e+00 : f32
    %73 = vector.broadcast %cst_57 : f32 to vector<16x200xf32>
    %c0_58 = arith.constant 0 : index
    %c0_59 = arith.constant 0 : index
    %74 = vector.load %arg11[%c0_58, %c0_59] : memref<8x222xbf16, #tpu.memory_space<vmem>>, vector<8x200xbf16>
    %c0_60 = arith.constant 0 : index
    %c0_61 = arith.constant 0 : index
    %c0_62 = arith.constant 0 : index
    %75 = vector.load %arg4[%c0_60, %c0_61, %c0_62] : memref<9x16x8xbf16, #tpu.memory_space<vmem>>, vector<1x16x8xbf16>
    %76 = vector.shape_cast %75 : vector<1x16x8xbf16> to vector<16x8xbf16>
    %cst_63 = arith.constant dense<0.000000e+00> : vector<16x200xf32>
    %77 = tpu.matmul %76, %74, %cst_63 {dimension_numbers = #tpu.dot_dimension_numbers<[1], [0], [0], [1], [0, 0, 1, 1], [], []>} : vector<16x8xbf16>, vector<8x200xbf16>, vector<16x200xf32> -> vector<16x200xf32>
    %78 = arith.addf %73, %77 : vector<16x200xf32>
    %c0_64 = arith.constant 0 : index
    %c1_65 = arith.constant 1 : index
    %79 = vector.load %arg11[%c0_64, %c1_65] : memref<8x222xbf16, #tpu.memory_space<vmem>>, vector<8x200xbf16>
    %c1_66 = arith.constant 1 : index
    %c0_67 = arith.constant 0 : index
    %c0_68 = arith.constant 0 : index
    %80 = vector.load %arg4[%c1_66, %c0_67, %c0_68] : memref<9x16x8xbf16, #tpu.memory_space<vmem>>, vector<1x16x8xbf16>
    %81 = vector.shape_cast %80 : vector<1x16x8xbf16> to vector<16x8xbf16>
    %cst_69 = arith.constant dense<0.000000e+00> : vector<16x200xf32>
    %82 = tpu.matmul %81, %79, %cst_69 {dimension_numbers = #tpu.dot_dimension_numbers<[1], [0], [0], [1], [0, 0, 1, 1], [], []>} : vector<16x8xbf16>, vector<8x200xbf16>, vector<16x200xf32> -> vector<16x200xf32>
    %83 = arith.addf %78, %82 : vector<16x200xf32>
    %c0_70 = arith.constant 0 : index
    %c2_71 = arith.constant 2 : index
    %84 = vector.load %arg11[%c0_70, %c2_71] : memref<8x222xbf16, #tpu.memory_space<vmem>>, vector<8x200xbf16>
    %c2_72 = arith.constant 2 : index
    %c0_73 = arith.constant 0 : index
    %c0_74 = arith.constant 0 : index
    %85 = vector.load %arg4[%c2_72, %c0_73, %c0_74] : memref<9x16x8xbf16, #tpu.memory_space<vmem>>, vector<1x16x8xbf16>
    %86 = vector.shape_cast %85 : vector<1x16x8xbf16> to vector<16x8xbf16>
    %cst_75 = arith.constant dense<0.000000e+00> : vector<16x200xf32>
    %87 = tpu.matmul %86, %84, %cst_75 {dimension_numbers = #tpu.dot_dimension_numbers<[1], [0], [0], [1], [0, 0, 1, 1], [], []>} : vector<16x8xbf16>, vector<8x200xbf16>, vector<16x200xf32> -> vector<16x200xf32>
    %88 = arith.addf %83, %87 : vector<16x200xf32>
    %c0_76 = arith.constant 0 : index
    %c10 = arith.constant 10 : index
    %89 = vector.load %arg11[%c0_76, %c10] : memref<8x222xbf16, #tpu.memory_space<vmem>>, vector<8x200xbf16>
    %c3_77 = arith.constant 3 : index
    %c0_78 = arith.constant 0 : index
    %c0_79 = arith.constant 0 : index
    %90 = vector.load %arg4[%c3_77, %c0_78, %c0_79] : memref<9x16x8xbf16, #tpu.memory_space<vmem>>, vector<1x16x8xbf16>
    %91 = vector.shape_cast %90 : vector<1x16x8xbf16> to vector<16x8xbf16>
    %cst_80 = arith.constant dense<0.000000e+00> : vector<16x200xf32>
    %92 = tpu.matmul %91, %89, %cst_80 {dimension_numbers = #tpu.dot_dimension_numbers<[1], [0], [0], [1], [0, 0, 1, 1], [], []>} : vector<16x8xbf16>, vector<8x200xbf16>, vector<16x200xf32> -> vector<16x200xf32>
    %93 = arith.addf %88, %92 : vector<16x200xf32>
    %c0_81 = arith.constant 0 : index
    %c11 = arith.constant 11 : index
    %94 = vector.load %arg11[%c0_81, %c11] : memref<8x222xbf16, #tpu.memory_space<vmem>>, vector<8x200xbf16>
    %c4_82 = arith.constant 4 : index
    %c0_83 = arith.constant 0 : index
    %c0_84 = arith.constant 0 : index
    %95 = vector.load %arg4[%c4_82, %c0_83, %c0_84] : memref<9x16x8xbf16, #tpu.memory_space<vmem>>, vector<1x16x8xbf16>
    %96 = vector.shape_cast %95 : vector<1x16x8xbf16> to vector<16x8xbf16>
    %cst_85 = arith.constant dense<0.000000e+00> : vector<16x200xf32>
    %97 = tpu.matmul %96, %94, %cst_85 {dimension_numbers = #tpu.dot_dimension_numbers<[1], [0], [0], [1], [0, 0, 1, 1], [], []>} : vector<16x8xbf16>, vector<8x200xbf16>, vector<16x200xf32> -> vector<16x200xf32>
    %98 = arith.addf %93, %97 : vector<16x200xf32>
    %c0_86 = arith.constant 0 : index
    %c12 = arith.constant 12 : index
    %99 = vector.load %arg11[%c0_86, %c12] : memref<8x222xbf16, #tpu.memory_space<vmem>>, vector<8x200xbf16>
    %c5_87 = arith.constant 5 : index
    %c0_88 = arith.constant 0 : index
    %c0_89 = arith.constant 0 : index
    %100 = vector.load %arg4[%c5_87, %c0_88, %c0_89] : memref<9x16x8xbf16, #tpu.memory_space<vmem>>, vector<1x16x8xbf16>
    %101 = vector.shape_cast %100 : vector<1x16x8xbf16> to vector<16x8xbf16>
    %cst_90 = arith.constant dense<0.000000e+00> : vector<16x200xf32>
    %102 = tpu.matmul %101, %99, %cst_90 {dimension_numbers = #tpu.dot_dimension_numbers<[1], [0], [0], [1], [0, 0, 1, 1], [], []>} : vector<16x8xbf16>, vector<8x200xbf16>, vector<16x200xf32> -> vector<16x200xf32>
    %103 = arith.addf %98, %102 : vector<16x200xf32>
    %c0_91 = arith.constant 0 : index
    %c20_92 = arith.constant 20 : index
    %104 = vector.load %arg11[%c0_91, %c20_92] : memref<8x222xbf16, #tpu.memory_space<vmem>>, vector<8x200xbf16>
    %c6_93 = arith.constant 6 : index
    %c0_94 = arith.constant 0 : index
    %c0_95 = arith.constant 0 : index
    %105 = vector.load %arg4[%c6_93, %c0_94, %c0_95] : memref<9x16x8xbf16, #tpu.memory_space<vmem>>, vector<1x16x8xbf16>
    %106 = vector.shape_cast %105 : vector<1x16x8xbf16> to vector<16x8xbf16>
    %cst_96 = arith.constant dense<0.000000e+00> : vector<16x200xf32>
    %107 = tpu.matmul %106, %104, %cst_96 {dimension_numbers = #tpu.dot_dimension_numbers<[1], [0], [0], [1], [0, 0, 1, 1], [], []>} : vector<16x8xbf16>, vector<8x200xbf16>, vector<16x200xf32> -> vector<16x200xf32>
    %108 = arith.addf %103, %107 : vector<16x200xf32>
    %c0_97 = arith.constant 0 : index
    %c21 = arith.constant 21 : index
    %109 = vector.load %arg11[%c0_97, %c21] : memref<8x222xbf16, #tpu.memory_space<vmem>>, vector<8x200xbf16>
    %c7_98 = arith.constant 7 : index
    %c0_99 = arith.constant 0 : index
    %c0_100 = arith.constant 0 : index
    %110 = vector.load %arg4[%c7_98, %c0_99, %c0_100] : memref<9x16x8xbf16, #tpu.memory_space<vmem>>, vector<1x16x8xbf16>
    %111 = vector.shape_cast %110 : vector<1x16x8xbf16> to vector<16x8xbf16>
    %cst_101 = arith.constant dense<0.000000e+00> : vector<16x200xf32>
    %112 = tpu.matmul %111, %109, %cst_101 {dimension_numbers = #tpu.dot_dimension_numbers<[1], [0], [0], [1], [0, 0, 1, 1], [], []>} : vector<16x8xbf16>, vector<8x200xbf16>, vector<16x200xf32> -> vector<16x200xf32>
    %113 = arith.addf %108, %112 : vector<16x200xf32>
    %c0_102 = arith.constant 0 : index
    %c22 = arith.constant 22 : index
    %114 = vector.load %arg11[%c0_102, %c22] : memref<8x222xbf16, #tpu.memory_space<vmem>>, vector<8x200xbf16>
    %c8_103 = arith.constant 8 : index
    %c0_104 = arith.constant 0 : index
    %c0_105 = arith.constant 0 : index
    %115 = vector.load %arg4[%c8_103, %c0_104, %c0_105] : memref<9x16x8xbf16, #tpu.memory_space<vmem>>, vector<1x16x8xbf16>
    %116 = vector.shape_cast %115 : vector<1x16x8xbf16> to vector<16x8xbf16>
    %cst_106 = arith.constant dense<0.000000e+00> : vector<16x200xf32>
    %117 = tpu.matmul %116, %114, %cst_106 {dimension_numbers = #tpu.dot_dimension_numbers<[1], [0], [0], [1], [0, 0, 1, 1], [], []>} : vector<16x8xbf16>, vector<8x200xbf16>, vector<16x200xf32> -> vector<16x200xf32>
    %118 = arith.addf %113, %117 : vector<16x200xf32>
    %c0_107 = arith.constant 0 : index
    %c0_108 = arith.constant 0 : index
    %119 = vector.load %arg5[%c0_107, %c0_108] : memref<16x1xf32, #tpu.memory_space<vmem>>, vector<16x1xf32>
    %120 = vector.broadcast %119 : vector<16x1xf32> to vector<16x200xf32>
    %121 = arith.addf %118, %120 : vector<16x200xf32>
    %cst_109 = arith.constant 0.000000e+00 : f32
    %122 = vector.broadcast %cst_109 : f32 to vector<16x200xf32>
    %123 = arith.maximumf %121, %122 : vector<16x200xf32>
    %c0_110 = arith.constant 0 : index
    %c0_111 = arith.constant 0 : index
    %124 = vector.load %arg12[%c0_110, %c0_111] : memref<16x200xf32, #tpu.memory_space<vmem>>, vector<16x200xf32>
    tpu.vector_store %arg12[%c0_110, %c0_111], %123 {strides = array<i32>} : memref<16x200xf32, #tpu.memory_space<vmem>>, vector<16x200xf32>,
    %c0_112 = arith.constant 0 : index
    %c0_113 = arith.constant 0 : index
    %125 = vector.load %arg12[%c0_112, %c0_113] : memref<16x200xf32, #tpu.memory_space<vmem>>, vector<16x189xf32>
    %c0_114 = arith.constant 0 : index
    %c1_115 = arith.constant 1 : index
    %126 = vector.load %arg12[%c0_114, %c1_115] : memref<16x200xf32, #tpu.memory_space<vmem>>, vector<16x189xf32>
    %127 = arith.maximumf %125, %126 : vector<16x189xf32>
    %c0_116 = arith.constant 0 : index
    %c10_117 = arith.constant 10 : index
    %128 = vector.load %arg12[%c0_116, %c10_117] : memref<16x200xf32, #tpu.memory_space<vmem>>, vector<16x189xf32>
    %c0_118 = arith.constant 0 : index
    %c11_119 = arith.constant 11 : index
    %129 = vector.load %arg12[%c0_118, %c11_119] : memref<16x200xf32, #tpu.memory_space<vmem>>, vector<16x189xf32>
    %130 = arith.maximumf %128, %129 : vector<16x189xf32>
    %131 = arith.maximumf %127, %130 : vector<16x189xf32>
    %132 = arith.truncf %131 : vector<16x189xf32> to vector<16x189xbf16>
    %c0_120 = arith.constant 0 : index
    %c0_121 = arith.constant 0 : index
    %133 = vector.load %arg8[%c0_120, %c0_121] : memref<32x1xf32, #tpu.memory_space<vmem>>, vector<32x1xf32>
    %c0_122 = arith.constant 0 : index
    %c0_123 = arith.constant 0 : index
    %134 = vector.load %arg6[%c0_122, %c0_123] : memref<189x8xbf16, #tpu.memory_space<vmem>>, vector<189x2xbf16>
    %cst_124 = arith.constant dense<0.000000e+00> : vector<16x2xf32>
    %135 = tpu.matmul %132, %134, %cst_124 {dimension_numbers = #tpu.dot_dimension_numbers<[1], [0], [0], [1], [0, 0, 1, 1], [], []>} : vector<16x189xbf16>, vector<189x2xbf16>, vector<16x2xf32> -> vector<16x2xf32>
    %c0_125 = arith.constant 0 : index
    %c0_126 = arith.constant 0 : index
    %c0_127 = arith.constant 0 : index
    %136 = vector.load %arg7[%c0_125, %c0_126, %c0_127] : memref<4x32x16xf32, #tpu.memory_space<vmem>>, vector<1x32x16xf32>
    %137 = vector.shape_cast %136 : vector<1x32x16xf32> to vector<32x16xf32>
    %cst_128 = arith.constant dense<0.000000e+00> : vector<32x2xf32>
    %138 = tpu.matmul %137, %135, %cst_128 {dimension_numbers = #tpu.dot_dimension_numbers<[1], [0], [0], [1], [0, 0, 1, 1], [], []>} : vector<32x16xf32>, vector<16x2xf32>, vector<32x2xf32> -> vector<32x2xf32>
    %139 = vector.broadcast %133 : vector<32x1xf32> to vector<32x2xf32>
    %140 = arith.addf %139, %138 : vector<32x2xf32>
    %c0_129 = arith.constant 0 : index
    %c2_130 = arith.constant 2 : index
    %141 = vector.load %arg6[%c0_129, %c2_130] : memref<189x8xbf16, #tpu.memory_space<vmem>>, vector<189x2xbf16>
    %cst_131 = arith.constant dense<0.000000e+00> : vector<16x2xf32>
    %142 = tpu.matmul %132, %141, %cst_131 {dimension_numbers = #tpu.dot_dimension_numbers<[1], [0], [0], [1], [0, 0, 1, 1], [], []>} : vector<16x189xbf16>, vector<189x2xbf16>, vector<16x2xf32> -> vector<16x2xf32>
    %c1_132 = arith.constant 1 : index
    %c0_133 = arith.constant 0 : index
    %c0_134 = arith.constant 0 : index
    %143 = vector.load %arg7[%c1_132, %c0_133, %c0_134] : memref<4x32x16xf32, #tpu.memory_space<vmem>>, vector<1x32x16xf32>
    %144 = vector.shape_cast %143 : vector<1x32x16xf32> to vector<32x16xf32>
    %cst_135 = arith.constant dense<0.000000e+00> : vector<32x2xf32>
    %145 = tpu.matmul %144, %142, %cst_135 {dimension_numbers = #tpu.dot_dimension_numbers<[1], [0], [0], [1], [0, 0, 1, 1], [], []>} : vector<32x16xf32>, vector<16x2xf32>, vector<32x2xf32> -> vector<32x2xf32>
    %146 = arith.addf %140, %145 : vector<32x2xf32>
    %c0_136 = arith.constant 0 : index
    %c4_137 = arith.constant 4 : index
    %147 = vector.load %arg6[%c0_136, %c4_137] : memref<189x8xbf16, #tpu.memory_space<vmem>>, vector<189x2xbf16>
    %cst_138 = arith.constant dense<0.000000e+00> : vector<16x2xf32>
    %148 = tpu.matmul %132, %147, %cst_138 {dimension_numbers = #tpu.dot_dimension_numbers<[1], [0], [0], [1], [0, 0, 1, 1], [], []>} : vector<16x189xbf16>, vector<189x2xbf16>, vector<16x2xf32> -> vector<16x2xf32>
    %c2_139 = arith.constant 2 : index
    %c0_140 = arith.constant 0 : index
    %c0_141 = arith.constant 0 : index
    %149 = vector.load %arg7[%c2_139, %c0_140, %c0_141] : memref<4x32x16xf32, #tpu.memory_space<vmem>>, vector<1x32x16xf32>
    %150 = vector.shape_cast %149 : vector<1x32x16xf32> to vector<32x16xf32>
    %cst_142 = arith.constant dense<0.000000e+00> : vector<32x2xf32>
    %151 = tpu.matmul %150, %148, %cst_142 {dimension_numbers = #tpu.dot_dimension_numbers<[1], [0], [0], [1], [0, 0, 1, 1], [], []>} : vector<32x16xf32>, vector<16x2xf32>, vector<32x2xf32> -> vector<32x2xf32>
    %152 = arith.addf %146, %151 : vector<32x2xf32>
    %c0_143 = arith.constant 0 : index
    %c6_144 = arith.constant 6 : index
    %153 = vector.load %arg6[%c0_143, %c6_144] : memref<189x8xbf16, #tpu.memory_space<vmem>>, vector<189x2xbf16>
    %cst_145 = arith.constant dense<0.000000e+00> : vector<16x2xf32>
    %154 = tpu.matmul %132, %153, %cst_145 {dimension_numbers = #tpu.dot_dimension_numbers<[1], [0], [0], [1], [0, 0, 1, 1], [], []>} : vector<16x189xbf16>, vector<189x2xbf16>, vector<16x2xf32> -> vector<16x2xf32>
    %c3_146 = arith.constant 3 : index
    %c0_147 = arith.constant 0 : index
    %c0_148 = arith.constant 0 : index
    %155 = vector.load %arg7[%c3_146, %c0_147, %c0_148] : memref<4x32x16xf32, #tpu.memory_space<vmem>>, vector<1x32x16xf32>
    %156 = vector.shape_cast %155 : vector<1x32x16xf32> to vector<32x16xf32>
    %cst_149 = arith.constant dense<0.000000e+00> : vector<32x2xf32>
    %157 = tpu.matmul %156, %154, %cst_149 {dimension_numbers = #tpu.dot_dimension_numbers<[1], [0], [0], [1], [0, 0, 1, 1], [], []>} : vector<32x16xf32>, vector<16x2xf32>, vector<32x2xf32> -> vector<32x2xf32>
    %158 = arith.addf %152, %157 : vector<32x2xf32>
    %c0_150 = arith.constant 0 : index
    %c0_151 = arith.constant 0 : index
    %159 = vector.load %arg9[%c0_150, %c0_151] : memref<32x2xf32, #tpu.memory_space<vmem>>, vector<32x2xf32>
    tpu.vector_store %arg9[%c0_150, %c0_151], %158 {strides = array<i32>} : memref<32x2xf32, #tpu.memory_space<vmem>>, vector<32x2xf32>,
    return
  }
}

</mosaic_0001>

<llo_original>
// kernel: forward.1
$region0: #{forward.1}
  #allocation0 [shape = 'u32[]', space=smem, size = 0x4, offset = 0x4, fixed_abs, tag = 'smem constant byte address 0x4 - core index']
  #allocation1 [shape = 'u32[72,128]{1,0:T(1,128)}', space=vmem, size = 0x9000, scoped, tag = 'internal scratch']
  #allocation2 [shape = 'f32[8,648]{1,0:T(8,128)}', space=vmem, size = 0x6000, scoped, tag = 'scratch operand']
  #allocation3 [shape = 'bf16[8,222]{1,0:T(8,128)(2,1)}', space=vmem, size = 0x1000, scoped, tag = 'scratch operand']
  #allocation4 [shape = 'f32[16,200]{1,0:T(8,128)}', space=vmem, size = 0x4000, scoped, tag = 'scratch operand']
  %s0 = inlined_call_operand.vmem [shape: f32[8,686], index: 0, kind: input, shape index: {}]
  %s1 = inlined_call_operand.vmem [shape: bf16[9,8,8], index: 1, kind: input, shape index: {}]
  %s2 = inlined_call_operand.vmem [shape: f32[8,1], index: 2, kind: input, shape index: {}]
  %s3 = inlined_call_operand.vmem [shape: bf16[629,222], index: 3, kind: input, shape index: {}]
  %s4 = inlined_call_operand.vmem [shape: bf16[9,16,8], index: 4, kind: input, shape index: {}]
  %s5 = inlined_call_operand.vmem [shape: f32[16,1], index: 5, kind: input, shape index: {}]
  %s6 = inlined_call_operand.vmem [shape: bf16[189,8], index: 6, kind: input, shape index: {}]
  %s7 = inlined_call_operand.vmem [shape: f32[4,32,16], index: 7, kind: input, shape index: {}]
  %s8 = inlined_call_operand.vmem [shape: f32[32,1], index: 8, kind: input, shape index: {}]
  %s9 = inlined_call_operand.vmem [shape: f32[32,2], index: 9, kind: output, shape index: {}]
  %s10 = sld [smem:[#allocation0]]
  $region46: #{forward.1} parent=0
    _
  %s12 = ssub.s32 1, %s10
  %s13 = scalar_select 0, %s12, %s10
  // Predicated region
  $region2: #{forward.1} parent=0 // pred_check
    _
  $region3: #{forward.1} parent=0 // pred_check_branch
    %15 = sbr.rel (0) target = $region5
  $region4: #{forward.1} parent=0 // pred_region
    _
  $region5: #{forward.1} parent=0 // pred_fallthru
    _
  // Predicated region
  $region6: #{forward.1} parent=0 // pred_check
    _
  $region7: #{forward.1} parent=0 // pred_check_branch
    %17 = sbr.rel (0) target = $region9
  $region8: #{forward.1} parent=0 // pred_region
    _
  $region9: #{forward.1} parent=0 // pred_fallthru
    _
  // Predicated region
  $region10: #{forward.1} parent=0 // pred_check
    _
  $region11: #{forward.1} parent=0 // pred_check_branch
    %19 = sbr.rel (0) target = $region13
  $region12: #{forward.1} parent=0 // pred_region
    _
  $region13: #{forward.1} parent=0 // pred_fallthru
    _
  // Predicated region
  $region14: #{forward.1} parent=0 // pred_check
    _
  $region15: #{forward.1} parent=0 // pred_check_branch
    %21 = sbr.rel (0) target = $region17
  $region16: #{forward.1} parent=0 // pred_region
    _
  $region17: #{forward.1} parent=0 // pred_fallthru
    _
  // Predicated region
  $region18: #{forward.1} parent=0 // pred_check
    _
  $region19: #{forward.1} parent=0 // pred_check_branch
    %23 = sbr.rel (0) target = $region21
  $region20: #{forward.1} parent=0 // pred_region
    _
  $region21: #{forward.1} parent=0 // pred_fallthru
    _
  // Predicated region
  $region22: #{forward.1} parent=0 // pred_check
    _
  $region23: #{forward.1} parent=0 // pred_check_branch
    %25 = sbr.rel (0) target = $region25
  $region24: #{forward.1} parent=0 // pred_region
    _
  $region25: #{forward.1} parent=0 // pred_fallthru
    _
  // Predicated region
  $region26: #{forward.1} parent=0 // pred_check
    _
  $region27: #{forward.1} parent=0 // pred_check_branch
    %27 = sbr.rel (0) target = $region29
  $region28: #{forward.1} parent=0 // pred_region
    _
  $region29: #{forward.1} parent=0 // pred_fallthru
    _
  // Predicated region
  $region30: #{forward.1} parent=0 // pred_check
    _
  $region31: #{forward.1} parent=0 // pred_check_branch
    %29 = sbr.rel (0) target = $region33
  $region32: #{forward.1} parent=0 // pred_region
    _
  $region33: #{forward.1} parent=0 // pred_fallthru
    _
  // Predicated region
  $region34: #{forward.1} parent=0 // pred_check
    _
  $region35: #{forward.1} parent=0 // pred_check_branch
    %31 = sbr.rel (0) target = $region37
  $region36: #{forward.1} parent=0 // pred_region
    _
  $region37: #{forward.1} parent=0 // pred_fallthru
    _
  %v33 = vld [vmem:[%s0] sm:$0xff]
  %v34 = vld [vmem:[%s0 + $0x8] sm:$0xff]
  %v35 = vld [vmem:[%s0 + $0x10] sm:$0xff]
  %v36 = vld [vmem:[%s0 + $0x18] sm:$0xff]
  %v37 = vld [vmem:[%s0 + $0x20] sm:$0xff]
  %v38 = vld [vmem:[%s0 + $0x28] sm:$0xff]
  %v39 = vpack.c.bf16 %v33, %v33
  %v40 = vpack.c.bf16 %v34, %v34
  %v41 = vpack.c.bf16 %v35, %v35
  %v42 = vpack.c.bf16 %v36, %v36
  %v43 = vpack.c.bf16 %v37, %v37
  %v44 = vpack.c.bf16 %v38, %v38
  %v45 = vld [vmem:[%s1] sm:$0xf]
  %s46 = scalar_lea.vmem %s1, 4
  %v47 = vld [vmem:[%s46] sm:$0xf]
  %54 = vrot.lane.b32.xlu0 %v39, 127
  %v55 = vpop.permute.xlu0 %54
  %56 = vrot.lane.b32.xlu0 %v40, 127
  %v57 = vpop.permute.xlu0 %56
  %58 = vrot.lane.b32.xlu0 %v41, 127
  %v59 = vpop.permute.xlu0 %58
  %60 = vrot.lane.b32.xlu0 %v42, 127
  %v61 = vpop.permute.xlu0 %60
  %62 = vrot.lane.b32.xlu0 %v43, 127
  %v63 = vpop.permute.xlu0 %62
  %64 = vrot.lane.b32.xlu0 %v44, 127
  %v65 = vpop.permute.xlu0 %64
  %vm66 = vcmask 1039360
  %v67 = vsel %vm66, %v55, %v57
  %v68 = vsel %vm66, %v57, %v59
  %v69 = vsel %vm66, %v59, %v61
  %v70 = vsel %vm66, %v61, %v63
  %v71 = vsel %vm66, %v63, %v65
  %vm72 = vcmask 64512
  %v74 = vsel %vm72, %v47, 0
  %vm76 = vcmask 1043456
  %v78 = vsel %vm76, %v67, 0
  %v81 = vsel %vm76, %v68, 0
  %v84 = vsel %vm76, %v69, 0
  %v87 = vsel %vm76, %v70, 0
  %v90 = vsel %vm76, %v71, 0
  %v93 = vsel %vm76, %v65, 0
  %95 = vmatpush.bf16.msra.mxu0 0
  %96 = vmatpush.bf16.msra.mxu0 0
  %97 = vmatpush.bf16.msra.mxu0 0
  %98 = vmatpush.bf16.msra.mxu0 0
  %99 = vmatpush.bf16.msra.mxu0 0
  %100 = vmatpush.bf16.msra.mxu0 0
  %101 = vmatpush.bf16.msra.mxu0 0
  %102 = vmatpush.bf16.msra.mxu0 %v78
  %103 = vmatmul.bf16.gmra.mxu0 %v74
  %v104 = vpop.f32.mrf.mxu0
  %v105 = vadd.f32 0.0, %v104
  %v106 = vpop.f32.mrf.mxu0
  %107 = vdwg.mxu0
  %108 = vmatpush.bf16.msra.mxu0 0
  %109 = vmatpush.bf16.msra.mxu0 0
  %110 = vmatpush.bf16.msra.mxu0 0
  %111 = vmatpush.bf16.msra.mxu0 0
  %112 = vmatpush.bf16.msra.mxu0 0
  %113 = vmatpush.bf16.msra.mxu0 0
  %114 = vmatpush.bf16.msra.mxu0 0
  %115 = vmatpush.bf16.msra.mxu0 %v81
  %116 = vmatmul.bf16.gmra.mxu0 %v74
  %v117 = vpop.f32.mrf.mxu0
  %v118 = vadd.f32 0.0, %v117
  %v119 = vpop.f32.mrf.mxu0
  %120 = vdwg.mxu0
  %121 = vmatpush.bf16.msra.mxu0 0
  %122 = vmatpush.bf16.msra.mxu0 0
  %123 = vmatpush.bf16.msra.mxu0 0
  %124 = vmatpush.bf16.msra.mxu0 0
  %125 = vmatpush.bf16.msra.mxu0 0
  %126 = vmatpush.bf16.msra.mxu0 0
  %127 = vmatpush.bf16.msra.mxu0 0
  %128 = vmatpush.bf16.msra.mxu0 %v84
  %129 = vmatmul.bf16.gmra.mxu0 %v74
  %v130 = vpop.f32.mrf.mxu0
  %v131 = vadd.f32 0.0, %v130
  %v132 = vpop.f32.mrf.mxu0
  %133 = vdwg.mxu0
  %134 = vmatpush.bf16.msra.mxu0 0
  %135 = vmatpush.bf16.msra.mxu0 0
  %136 = vmatpush.bf16.msra.mxu0 0
  %137 = vmatpush.bf16.msra.mxu0 0
  %138 = vmatpush.bf16.msra.mxu0 0
  %139 = vmatpush.bf16.msra.mxu0 0
  %140 = vmatpush.bf16.msra.mxu0 0
  %141 = vmatpush.bf16.msra.mxu0 %v87
  %142 = vmatmul.bf16.gmra.mxu0 %v74
  %v143 = vpop.f32.mrf.mxu0
  %v144 = vadd.f32 0.0, %v143
  %v145 = vpop.f32.mrf.mxu0
  %146 = vdwg.mxu0
  %147 = vmatpush.bf16.msra.mxu0 0
  %148 = vmatpush.bf16.msra.mxu0 0
  %149 = vmatpush.bf16.msra.mxu0 0
  %150 = vmatpush.bf16.msra.mxu0 0
  %151 = vmatpush.bf16.msra.mxu0 0
  %152 = vmatpush.bf16.msra.mxu0 0
  %153 = vmatpush.bf16.msra.mxu0 0
  %154 = vmatpush.bf16.msra.mxu0 %v90
  %155 = vmatmul.bf16.gmra.mxu0 %v74
  %v156 = vpop.f32.mrf.mxu0
  %v157 = vadd.f32 0.0, %v156
  %v158 = vpop.f32.mrf.mxu0
  %159 = vdwg.mxu0
  %160 = vmatpush.bf16.msra.mxu0 0
  %161 = vmatpush.bf16.msra.mxu0 0
  %162 = vmatpush.bf16.msra.mxu0 0
  %163 = vmatpush.bf16.msra.mxu0 0
  %164 = vmatpush.bf16.msra.mxu0 0
  %165 = vmatpush.bf16.msra.mxu0 0
  %166 = vmatpush.bf16.msra.mxu0 0
  %167 = vmatpush.bf16.msra.mxu0 %v93
  %168 = vmatmul.bf16.gmra.mxu0 %v74
  %v169 = vpop.f32.mrf.mxu0
  %v170 = vadd.f32 0.0, %v169
  %v171 = vpop.f32.mrf.mxu0
  %172 = vdwg.mxu0
  %v174 = vsel %vm72, %v45, 0
  %v177 = vsel %vm76, %v39, 0
  %v180 = vsel %vm76, %v40, 0
  %v183 = vsel %vm76, %v41, 0
  %v186 = vsel %vm76, %v42, 0
  %v189 = vsel %vm76, %v43, 0
  %v192 = vsel %vm76, %v44, 0
  %194 = vmatpush.bf16.msra.mxu0 0
  %195 = vmatpush.bf16.msra.mxu0 0
  %196 = vmatpush.bf16.msra.mxu0 0
  %197 = vmatpush.bf16.msra.mxu0 0
  %198 = vmatpush.bf16.msra.mxu0 0
  %199 = vmatpush.bf16.msra.mxu0 0
  %200 = vmatpush.bf16.msra.mxu0 0
  %201 = vmatpush.bf16.msra.mxu0 %v177
  %202 = vmatmul.bf16.gmra.mxu0 %v174
  %v203 = vpop.f32.mrf.mxu0
  %v204 = vadd.f32 %v105, %v203
  %v205 = vpop.f32.mrf.mxu0
  %206 = vdwg.mxu0
  %207 = vmatpush.bf16.msra.mxu0 0
  %208 = vmatpush.bf16.msra.mxu0 0
  %209 = vmatpush.bf16.msra.mxu0 0
  %210 = vmatpush.bf16.msra.mxu0 0
  %211 = vmatpush.bf16.msra.mxu0 0
  %212 = vmatpush.bf16.msra.mxu0 0
  %213 = vmatpush.bf16.msra.mxu0 0
  %214 = vmatpush.bf16.msra.mxu0 %v180
  %215 = vmatmul.bf16.gmra.mxu0 %v174
  %v216 = vpop.f32.mrf.mxu0
  %v217 = vadd.f32 %v118, %v216
  %v218 = vpop.f32.mrf.mxu0
  %219 = vdwg.mxu0
  %220 = vmatpush.bf16.msra.mxu0 0
  %221 = vmatpush.bf16.msra.mxu0 0
  %222 = vmatpush.bf16.msra.mxu0 0
  %223 = vmatpush.bf16.msra.mxu0 0
  %224 = vmatpush.bf16.msra.mxu0 0
  %225 = vmatpush.bf16.msra.mxu0 0
  %226 = vmatpush.bf16.msra.mxu0 0
  %227 = vmatpush.bf16.msra.mxu0 %v183
  %228 = vmatmul.bf16.gmra.mxu0 %v174
  %v229 = vpop.f32.mrf.mxu0
  %v230 = vadd.f32 %v131, %v229
  %v231 = vpop.f32.mrf.mxu0
  %232 = vdwg.mxu0
  %233 = vmatpush.bf16.msra.mxu0 0
  %234 = vmatpush.bf16.msra.mxu0 0
  %235 = vmatpush.bf16.msra.mxu0 0
  %236 = vmatpush.bf16.msra.mxu0 0
  %237 = vmatpush.bf16.msra.mxu0 0
  %238 = vmatpush.bf16.msra.mxu0 0
  %239 = vmatpush.bf16.msra.mxu0 0
  %240 = vmatpush.bf16.msra.mxu0 %v186
  %241 = vmatmul.bf16.gmra.mxu0 %v174
  %v242 = vpop.f32.mrf.mxu0
  %v243 = vadd.f32 %v144, %v242
  %v244 = vpop.f32.mrf.mxu0
  %245 = vdwg.mxu0
  %246 = vmatpush.bf16.msra.mxu0 0
  %247 = vmatpush.bf16.msra.mxu0 0
  %248 = vmatpush.bf16.msra.mxu0 0
  %249 = vmatpush.bf16.msra.mxu0 0
  %250 = vmatpush.bf16.msra.mxu0 0
  %251 = vmatpush.bf16.msra.mxu0 0
  %252 = vmatpush.bf16.msra.mxu0 0
  %253 = vmatpush.bf16.msra.mxu0 %v189
  %254 = vmatmul.bf16.gmra.mxu0 %v174
  %v255 = vpop.f32.mrf.mxu0
  %v256 = vadd.f32 %v157, %v255
  %v257 = vpop.f32.mrf.mxu0
  %258 = vdwg.mxu0
  %259 = vmatpush.bf16.msra.mxu0 0
  %260 = vmatpush.bf16.msra.mxu0 0
  %261 = vmatpush.bf16.msra.mxu0 0
  %262 = vmatpush.bf16.msra.mxu0 0
  %263 = vmatpush.bf16.msra.mxu0 0
  %264 = vmatpush.bf16.msra.mxu0 0
  %265 = vmatpush.bf16.msra.mxu0 0
  %266 = vmatpush.bf16.msra.mxu0 %v192
  %267 = vmatmul.bf16.gmra.mxu0 %v174
  %v268 = vpop.f32.mrf.mxu0
  %v269 = vadd.f32 %v170, %v268
  %v270 = vpop.f32.mrf.mxu0
  %271 = vdwg.mxu0
  %s272 = scalar_lea.vmem %s1, 8
  %v273 = vld [vmem:[%s272] sm:$0xf]
  %274 = vrot.lane.b32.xlu0 %v39, 126
  %v275 = vpop.permute.xlu0 %274
  %276 = vrot.lane.b32.xlu0 %v40, 126
  %v277 = vpop.permute.xlu0 %276
  %278 = vrot.lane.b32.xlu0 %v41, 126
  %v279 = vpop.permute.xlu0 %278
  %280 = vrot.lane.b32.xlu0 %v42, 126
  %v281 = vpop.permute.xlu0 %280
  %282 = vrot.lane.b32.xlu0 %v43, 126
  %v283 = vpop.permute.xlu0 %282
  %284 = vrot.lane.b32.xlu0 %v44, 126
  %v285 = vpop.permute.xlu0 %284
  %vm286 = vcmask 1031168
  %v287 = vsel %vm286, %v275, %v277
  %v288 = vsel %vm286, %v277, %v279
  %v289 = vsel %vm286, %v279, %v281
  %v290 = vsel %vm286, %v281, %v283
  %v291 = vsel %vm286, %v283, %v285
  %v293 = vsel %vm72, %v273, 0
  %v296 = vsel %vm76, %v287, 0
  %v299 = vsel %vm76, %v288, 0
  %v302 = vsel %vm76, %v289, 0
  %v305 = vsel %vm76, %v290, 0
  %v308 = vsel %vm76, %v291, 0
  %v311 = vsel %vm76, %v285, 0
  %313 = vmatpush.bf16.msra.mxu0 0
  %314 = vmatpush.bf16.msra.mxu0 0
  %315 = vmatpush.bf16.msra.mxu0 0
  %316 = vmatpush.bf16.msra.mxu0 0
  %317 = vmatpush.bf16.msra.mxu0 0
  %318 = vmatpush.bf16.msra.mxu0 0
  %319 = vmatpush.bf16.msra.mxu0 0
  %320 = vmatpush.bf16.msra.mxu0 %v296
  %321 = vmatmul.bf16.gmra.mxu0 %v293
  %v322 = vpop.f32.mrf.mxu0
  %v323 = vadd.f32 0.0, %v322
  %v324 = vpop.f32.mrf.mxu0
  %325 = vdwg.mxu0
  %326 = vmatpush.bf16.msra.mxu0 0
  %327 = vmatpush.bf16.msra.mxu0 0
  %328 = vmatpush.bf16.msra.mxu0 0
  %329 = vmatpush.bf16.msra.mxu0 0
  %330 = vmatpush.bf16.msra.mxu0 0
  %331 = vmatpush.bf16.msra.mxu0 0
  %332 = vmatpush.bf16.msra.mxu0 0
  %333 = vmatpush.bf16.msra.mxu0 %v299
  %334 = vmatmul.bf16.gmra.mxu0 %v293
  %v335 = vpop.f32.mrf.mxu0
  %v336 = vadd.f32 0.0, %v335
  %v337 = vpop.f32.mrf.mxu0
  %338 = vdwg.mxu0
  %339 = vmatpush.bf16.msra.mxu0 0
  %340 = vmatpush.bf16.msra.mxu0 0
  %341 = vmatpush.bf16.msra.mxu0 0
  %342 = vmatpush.bf16.msra.mxu0 0
  %343 = vmatpush.bf16.msra.mxu0 0
  %344 = vmatpush.bf16.msra.mxu0 0
  %345 = vmatpush.bf16.msra.mxu0 0
  %346 = vmatpush.bf16.msra.mxu0 %v302
  %347 = vmatmul.bf16.gmra.mxu0 %v293
  %v348 = vpop.f32.mrf.mxu0
  %v349 = vadd.f32 0.0, %v348
  %v350 = vpop.f32.mrf.mxu0
  %351 = vdwg.mxu0
  %352 = vmatpush.bf16.msra.mxu0 0
  %353 = vmatpush.bf16.msra.mxu0 0
  %354 = vmatpush.bf16.msra.mxu0 0
  %355 = vmatpush.bf16.msra.mxu0 0
  %356 = vmatpush.bf16.msra.mxu0 0
  %357 = vmatpush.bf16.msra.mxu0 0
  %358 = vmatpush.bf16.msra.mxu0 0
  %359 = vmatpush.bf16.msra.mxu0 %v305
  %360 = vmatmul.bf16.gmra.mxu0 %v293
  %v361 = vpop.f32.mrf.mxu0
  %v362 = vadd.f32 0.0, %v361
  %v363 = vpop.f32.mrf.mxu0
  %364 = vdwg.mxu0
  %365 = vmatpush.bf16.msra.mxu0 0
  %366 = vmatpush.bf16.msra.mxu0 0
  %367 = vmatpush.bf16.msra.mxu0 0
  %368 = vmatpush.bf16.msra.mxu0 0
  %369 = vmatpush.bf16.msra.mxu0 0
  %370 = vmatpush.bf16.msra.mxu0 0
  %371 = vmatpush.bf16.msra.mxu0 0
  %372 = vmatpush.bf16.msra.mxu0 %v308
  %373 = vmatmul.bf16.gmra.mxu0 %v293
  %v374 = vpop.f32.mrf.mxu0
  %v375 = vadd.f32 0.0, %v374
  %v376 = vpop.f32.mrf.mxu0
  %377 = vdwg.mxu0
  %378 = vmatpush.bf16.msra.mxu0 0
  %379 = vmatpush.bf16.msra.mxu0 0
  %380 = vmatpush.bf16.msra.mxu0 0
  %381 = vmatpush.bf16.msra.mxu0 0
  %382 = vmatpush.bf16.msra.mxu0 0
  %383 = vmatpush.bf16.msra.mxu0 0
  %384 = vmatpush.bf16.msra.mxu0 0
  %385 = vmatpush.bf16.msra.mxu0 %v311
  %386 = vmatmul.bf16.gmra.mxu0 %v293
  %v387 = vpop.f32.mrf.mxu0
  %v388 = vadd.f32 0.0, %v387
  %v389 = vpop.f32.mrf.mxu0
  %390 = vdwg.mxu0
  %v391 = vadd.f32 %v204, %v323
  %v392 = vadd.f32 %v217, %v336
  %v393 = vadd.f32 %v230, %v349
  %v394 = vadd.f32 %v243, %v362
  %v395 = vadd.f32 %v256, %v375
  %v396 = vadd.f32 %v269, %v388
  %s397 = scalar_lea.vmem %s1, 12
  %v398 = vld [vmem:[%s397] sm:$0xf]
  %399 = vrot.lane.b32.xlu0 %v39, 110
  %v400 = vpop.permute.xlu0 %399
  %401 = vrot.lane.b32.xlu0 %v40, 110
  %v402 = vpop.permute.xlu0 %401
  %403 = vrot.lane.b32.xlu0 %v41, 110
  %v404 = vpop.permute.xlu0 %403
  %405 = vrot.lane.b32.xlu0 %v42, 110
  %v406 = vpop.permute.xlu0 %405
  %407 = vrot.lane.b32.xlu0 %v43, 110
  %v408 = vpop.permute.xlu0 %407
  %409 = vrot.lane.b32.xlu0 %v44, 110
  %v410 = vpop.permute.xlu0 %409
  %vm411 = vcmask 900096
  %v412 = vsel %vm411, %v400, %v402
  %v413 = vsel %vm411, %v402, %v404
  %v414 = vsel %vm411, %v404, %v406
  %v415 = vsel %vm411, %v406, %v408
  %v416 = vsel %vm411, %v408, %v410
  %v418 = vsel %vm72, %v398, 0
  %v421 = vsel %vm76, %v412, 0
  %v424 = vsel %vm76, %v413, 0
  %v427 = vsel %vm76, %v414, 0
  %v430 = vsel %vm76, %v415, 0
  %v433 = vsel %vm76, %v416, 0
  %v436 = vsel %vm76, %v410, 0
  %438 = vmatpush.bf16.msra.mxu0 0
  %439 = vmatpush.bf16.msra.mxu0 0
  %440 = vmatpush.bf16.msra.mxu0 0
  %441 = vmatpush.bf16.msra.mxu0 0
  %442 = vmatpush.bf16.msra.mxu0 0
  %443 = vmatpush.bf16.msra.mxu0 0
  %444 = vmatpush.bf16.msra.mxu0 0
  %445 = vmatpush.bf16.msra.mxu0 %v421
  %446 = vmatmul.bf16.gmra.mxu0 %v418
  %v447 = vpop.f32.mrf.mxu0
  %v448 = vadd.f32 0.0, %v447
  %v449 = vpop.f32.mrf.mxu0
  %450 = vdwg.mxu0
  %451 = vmatpush.bf16.msra.mxu0 0
  %452 = vmatpush.bf16.msra.mxu0 0
  %453 = vmatpush.bf16.msra.mxu0 0
  %454 = vmatpush.bf16.msra.mxu0 0
  %455 = vmatpush.bf16.msra.mxu0 0
  %456 = vmatpush.bf16.msra.mxu0 0
  %457 = vmatpush.bf16.msra.mxu0 0
  %458 = vmatpush.bf16.msra.mxu0 %v424
  %459 = vmatmul.bf16.gmra.mxu0 %v418
  %v460 = vpop.f32.mrf.mxu0
  %v461 = vadd.f32 0.0, %v460
  %v462 = vpop.f32.mrf.mxu0
  %463 = vdwg.mxu0
  %464 = vmatpush.bf16.msra.mxu0 0
  %465 = vmatpush.bf16.msra.mxu0 0
  %466 = vmatpush.bf16.msra.mxu0 0
  %467 = vmatpush.bf16.msra.mxu0 0
  %468 = vmatpush.bf16.msra.mxu0 0
  %469 = vmatpush.bf16.msra.mxu0 0
  %470 = vmatpush.bf16.msra.mxu0 0
  %471 = vmatpush.bf16.msra.mxu0 %v427
  %472 = vmatmul.bf16.gmra.mxu0 %v418
  %v473 = vpop.f32.mrf.mxu0
  %v474 = vadd.f32 0.0, %v473
  %v475 = vpop.f32.mrf.mxu0
  %476 = vdwg.mxu0
  %477 = vmatpush.bf16.msra.mxu0 0
  %478 = vmatpush.bf16.msra.mxu0 0
  %479 = vmatpush.bf16.msra.mxu0 0
  %480 = vmatpush.bf16.msra.mxu0 0
  %481 = vmatpush.bf16.msra.mxu0 0
  %482 = vmatpush.bf16.msra.mxu0 0
  %483 = vmatpush.bf16.msra.mxu0 0
  %484 = vmatpush.bf16.msra.mxu0 %v430
  %485 = vmatmul.bf16.gmra.mxu0 %v418
  %v486 = vpop.f32.mrf.mxu0
  %v487 = vadd.f32 0.0, %v486
  %v488 = vpop.f32.mrf.mxu0
  %489 = vdwg.mxu0
  %490 = vmatpush.bf16.msra.mxu0 0
  %491 = vmatpush.bf16.msra.mxu0 0
  %492 = vmatpush.bf16.msra.mxu0 0
  %493 = vmatpush.bf16.msra.mxu0 0
  %494 = vmatpush.bf16.msra.mxu0 0
  %495 = vmatpush.bf16.msra.mxu0 0
  %496 = vmatpush.bf16.msra.mxu0 0
  %497 = vmatpush.bf16.msra.mxu0 %v433
  %498 = vmatmul.bf16.gmra.mxu0 %v418
  %v499 = vpop.f32.mrf.mxu0
  %v500 = vadd.f32 0.0, %v499
  %v501 = vpop.f32.mrf.mxu0
  %502 = vdwg.mxu0
  %503 = vmatpush.bf16.msra.mxu0 0
  %504 = vmatpush.bf16.msra.mxu0 0
  %505 = vmatpush.bf16.msra.mxu0 0
  %506 = vmatpush.bf16.msra.mxu0 0
  %507 = vmatpush.bf16.msra.mxu0 0
  %508 = vmatpush.bf16.msra.mxu0 0
  %509 = vmatpush.bf16.msra.mxu0 0
  %510 = vmatpush.bf16.msra.mxu0 %v436
  %511 = vmatmul.bf16.gmra.mxu0 %v418
  %v512 = vpop.f32.mrf.mxu0
  %v513 = vadd.f32 0.0, %v512
  %v514 = vpop.f32.mrf.mxu0
  %515 = vdwg.mxu0
  %v516 = vadd.f32 %v391, %v448
  %v517 = vadd.f32 %v392, %v461
  %v518 = vadd.f32 %v393, %v474
  %v519 = vadd.f32 %v394, %v487
  %v520 = vadd.f32 %v395, %v500
  %v521 = vadd.f32 %v396, %v513
  %s522 = scalar_lea.vmem %s1, 16
  %v523 = vld [vmem:[%s522] sm:$0xf]
  %524 = vrot.lane.b32.xlu0 %v39, 109
  %v525 = vpop.permute.xlu0 %524
  %526 = vrot.lane.b32.xlu0 %v40, 109
  %v527 = vpop.permute.xlu0 %526
  %528 = vrot.lane.b32.xlu0 %v41, 109
  %v529 = vpop.permute.xlu0 %528
  %530 = vrot.lane.b32.xlu0 %v42, 109
  %v531 = vpop.permute.xlu0 %530
  %532 = vrot.lane.b32.xlu0 %v43, 109
  %v533 = vpop.permute.xlu0 %532
  %534 = vrot.lane.b32.xlu0 %v44, 109
  %v535 = vpop.permute.xlu0 %534
  %vm536 = vcmask 891904
  %v537 = vsel %vm536, %v525, %v527
  %v538 = vsel %vm536, %v527, %v529
  %v539 = vsel %vm536, %v529, %v531
  %v540 = vsel %vm536, %v531, %v533
  %v541 = vsel %vm536, %v533, %v535
  %v543 = vsel %vm72, %v523, 0
  %v546 = vsel %vm76, %v537, 0
  %v549 = vsel %vm76, %v538, 0
  %v552 = vsel %vm76, %v539, 0
  %v555 = vsel %vm76, %v540, 0
  %v558 = vsel %vm76, %v541, 0
  %v561 = vsel %vm76, %v535, 0
  %563 = vmatpush.bf16.msra.mxu0 0
  %564 = vmatpush.bf16.msra.mxu0 0
  %565 = vmatpush.bf16.msra.mxu0 0
  %566 = vmatpush.bf16.msra.mxu0 0
  %567 = vmatpush.bf16.msra.mxu0 0
  %568 = vmatpush.bf16.msra.mxu0 0
  %569 = vmatpush.bf16.msra.mxu0 0
  %570 = vmatpush.bf16.msra.mxu0 %v546
  %571 = vmatmul.bf16.gmra.mxu0 %v543
  %v572 = vpop.f32.mrf.mxu0
  %v573 = vadd.f32 0.0, %v572
  %v574 = vpop.f32.mrf.mxu0
  %575 = vdwg.mxu0
  %576 = vmatpush.bf16.msra.mxu0 0
  %577 = vmatpush.bf16.msra.mxu0 0
  %578 = vmatpush.bf16.msra.mxu0 0
  %579 = vmatpush.bf16.msra.mxu0 0
  %580 = vmatpush.bf16.msra.mxu0 0
  %581 = vmatpush.bf16.msra.mxu0 0
  %582 = vmatpush.bf16.msra.mxu0 0
  %583 = vmatpush.bf16.msra.mxu0 %v549
  %584 = vmatmul.bf16.gmra.mxu0 %v543
  %v585 = vpop.f32.mrf.mxu0
  %v586 = vadd.f32 0.0, %v585
  %v587 = vpop.f32.mrf.mxu0
  %588 = vdwg.mxu0
  %589 = vmatpush.bf16.msra.mxu0 0
  %590 = vmatpush.bf16.msra.mxu0 0
  %591 = vmatpush.bf16.msra.mxu0 0
  %592 = vmatpush.bf16.msra.mxu0 0
  %593 = vmatpush.bf16.msra.mxu0 0
  %594 = vmatpush.bf16.msra.mxu0 0
  %595 = vmatpush.bf16.msra.mxu0 0
  %596 = vmatpush.bf16.msra.mxu0 %v552
  %597 = vmatmul.bf16.gmra.mxu0 %v543
  %v598 = vpop.f32.mrf.mxu0
  %v599 = vadd.f32 0.0, %v598
  %v600 = vpop.f32.mrf.mxu0
  %601 = vdwg.mxu0
  %602 = vmatpush.bf16.msra.mxu0 0
  %603 = vmatpush.bf16.msra.mxu0 0
  %604 = vmatpush.bf16.msra.mxu0 0
  %605 = vmatpush.bf16.msra.mxu0 0
  %606 = vmatpush.bf16.msra.mxu0 0
  %607 = vmatpush.bf16.msra.mxu0 0
  %608 = vmatpush.bf16.msra.mxu0 0
  %609 = vmatpush.bf16.msra.mxu0 %v555
  %610 = vmatmul.bf16.gmra.mxu0 %v543
  %v611 = vpop.f32.mrf.mxu0
  %v612 = vadd.f32 0.0, %v611
  %v613 = vpop.f32.mrf.mxu0
  %614 = vdwg.mxu0
  %615 = vmatpush.bf16.msra.mxu0 0
  %616 = vmatpush.bf16.msra.mxu0 0
  %617 = vmatpush.bf16.msra.mxu0 0
  %618 = vmatpush.bf16.msra.mxu0 0
  %619 = vmatpush.bf16.msra.mxu0 0
  %620 = vmatpush.bf16.msra.mxu0 0
  %621 = vmatpush.bf16.msra.mxu0 0
  %622 = vmatpush.bf16.msra.mxu0 %v558
  %623 = vmatmul.bf16.gmra.mxu0 %v543
  %v624 = vpop.f32.mrf.mxu0
  %v625 = vadd.f32 0.0, %v624
  %v626 = vpop.f32.mrf.mxu0
  %627 = vdwg.mxu0
  %628 = vmatpush.bf16.msra.mxu0 0
  %629 = vmatpush.bf16.msra.mxu0 0
  %630 = vmatpush.bf16.msra.mxu0 0
  %631 = vmatpush.bf16.msra.mxu0 0
  %632 = vmatpush.bf16.msra.mxu0 0
  %633 = vmatpush.bf16.msra.mxu0 0
  %634 = vmatpush.bf16.msra.mxu0 0
  %635 = vmatpush.bf16.msra.mxu0 %v561
  %636 = vmatmul.bf16.gmra.mxu0 %v543
  %v637 = vpop.f32.mrf.mxu0
  %v638 = vadd.f32 0.0, %v637
  %v639 = vpop.f32.mrf.mxu0
  %640 = vdwg.mxu0
  %v641 = vadd.f32 %v516, %v573
  %v642 = vadd.f32 %v517, %v586
  %v643 = vadd.f32 %v518, %v599
  %v644 = vadd.f32 %v519, %v612
  %v645 = vadd.f32 %v520, %v625
  %v646 = vadd.f32 %v521, %v638
  %s647 = scalar_lea.vmem %s1, 20
  %v648 = vld [vmem:[%s647] sm:$0xf]
  %649 = vrot.lane.b32.xlu0 %v39, 108
  %v650 = vpop.permute.xlu0 %649
  %651 = vrot.lane.b32.xlu0 %v40, 108
  %v652 = vpop.permute.xlu0 %651
  %653 = vrot.lane.b32.xlu0 %v41, 108
  %v654 = vpop.permute.xlu0 %653
  %655 = vrot.lane.b32.xlu0 %v42, 108
  %v656 = vpop.permute.xlu0 %655
  %657 = vrot.lane.b32.xlu0 %v43, 108
  %v658 = vpop.permute.xlu0 %657
  %659 = vrot.lane.b32.xlu0 %v44, 108
  %v660 = vpop.permute.xlu0 %659
  %vm661 = vcmask 883712
  %v662 = vsel %vm661, %v650, %v652
  %v663 = vsel %vm661, %v652, %v654
  %v664 = vsel %vm661, %v654, %v656
  %v665 = vsel %vm661, %v656, %v658
  %v666 = vsel %vm661, %v658, %v660
  %v668 = vsel %vm72, %v648, 0
  %v671 = vsel %vm76, %v662, 0
  %v674 = vsel %vm76, %v663, 0
  %v677 = vsel %vm76, %v664, 0
  %v680 = vsel %vm76, %v665, 0
  %v683 = vsel %vm76, %v666, 0
  %v686 = vsel %vm76, %v660, 0
  %688 = vmatpush.bf16.msra.mxu0 0
  %689 = vmatpush.bf16.msra.mxu0 0
  %690 = vmatpush.bf16.msra.mxu0 0
  %691 = vmatpush.bf16.msra.mxu0 0
  %692 = vmatpush.bf16.msra.mxu0 0
  %693 = vmatpush.bf16.msra.mxu0 0
  %694 = vmatpush.bf16.msra.mxu0 0
  %695 = vmatpush.bf16.msra.mxu0 %v671
  %696 = vmatmul.bf16.gmra.mxu0 %v668
  %v697 = vpop.f32.mrf.mxu0
  %v698 = vadd.f32 0.0, %v697
  %v699 = vpop.f32.mrf.mxu0
  %700 = vdwg.mxu0
  %701 = vmatpush.bf16.msra.mxu0 0
  %702 = vmatpush.bf16.msra.mxu0 0
  %703 = vmatpush.bf16.msra.mxu0 0
  %704 = vmatpush.bf16.msra.mxu0 0
  %705 = vmatpush.bf16.msra.mxu0 0
  %706 = vmatpush.bf16.msra.mxu0 0
  %707 = vmatpush.bf16.msra.mxu0 0
  %708 = vmatpush.bf16.msra.mxu0 %v674
  %709 = vmatmul.bf16.gmra.mxu0 %v668
  %v710 = vpop.f32.mrf.mxu0
  %v711 = vadd.f32 0.0, %v710
  %v712 = vpop.f32.mrf.mxu0
  %713 = vdwg.mxu0
  %714 = vmatpush.bf16.msra.mxu0 0
  %715 = vmatpush.bf16.msra.mxu0 0
  %716 = vmatpush.bf16.msra.mxu0 0
  %717 = vmatpush.bf16.msra.mxu0 0
  %718 = vmatpush.bf16.msra.mxu0 0
  %719 = vmatpush.bf16.msra.mxu0 0
  %720 = vmatpush.bf16.msra.mxu0 0
  %721 = vmatpush.bf16.msra.mxu0 %v677
  %722 = vmatmul.bf16.gmra.mxu0 %v668
  %v723 = vpop.f32.mrf.mxu0
  %v724 = vadd.f32 0.0, %v723
  %v725 = vpop.f32.mrf.mxu0
  %726 = vdwg.mxu0
  %727 = vmatpush.bf16.msra.mxu0 0
  %728 = vmatpush.bf16.msra.mxu0 0
  %729 = vmatpush.bf16.msra.mxu0 0
  %730 = vmatpush.bf16.msra.mxu0 0
  %731 = vmatpush.bf16.msra.mxu0 0
  %732 = vmatpush.bf16.msra.mxu0 0
  %733 = vmatpush.bf16.msra.mxu0 0
  %734 = vmatpush.bf16.msra.mxu0 %v680
  %735 = vmatmul.bf16.gmra.mxu0 %v668
  %v736 = vpop.f32.mrf.mxu0
  %v737 = vadd.f32 0.0, %v736
  %v738 = vpop.f32.mrf.mxu0
  %739 = vdwg.mxu0
  %740 = vmatpush.bf16.msra.mxu0 0
  %741 = vmatpush.bf16.msra.mxu0 0
  %742 = vmatpush.bf16.msra.mxu0 0
  %743 = vmatpush.bf16.msra.mxu0 0
  %744 = vmatpush.bf16.msra.mxu0 0
  %745 = vmatpush.bf16.msra.mxu0 0
  %746 = vmatpush.bf16.msra.mxu0 0
  %747 = vmatpush.bf16.msra.mxu0 %v683
  %748 = vmatmul.bf16.gmra.mxu0 %v668
  %v749 = vpop.f32.mrf.mxu0
  %v750 = vadd.f32 0.0, %v749
  %v751 = vpop.f32.mrf.mxu0
  %752 = vdwg.mxu0
  %753 = vmatpush.bf16.msra.mxu0 0
  %754 = vmatpush.bf16.msra.mxu0 0
  %755 = vmatpush.bf16.msra.mxu0 0
  %756 = vmatpush.bf16.msra.mxu0 0
  %757 = vmatpush.bf16.msra.mxu0 0
  %758 = vmatpush.bf16.msra.mxu0 0
  %759 = vmatpush.bf16.msra.mxu0 0
  %760 = vmatpush.bf16.msra.mxu0 %v686
  %761 = vmatmul.bf16.gmra.mxu0 %v668
  %v762 = vpop.f32.mrf.mxu0
  %v763 = vadd.f32 0.0, %v762
  %v764 = vpop.f32.mrf.mxu0
  %765 = vdwg.mxu0
  %v766 = vadd.f32 %v641, %v698
  %v767 = vadd.f32 %v642, %v711
  %v768 = vadd.f32 %v643, %v724
  %v769 = vadd.f32 %v644, %v737
  %v770 = vadd.f32 %v645, %v750
  %v771 = vadd.f32 %v646, %v763
  %s772 = scalar_lea.vmem %s1, 24
  %v773 = vld [vmem:[%s772] sm:$0xf]
  %774 = vrot.lane.b32.xlu0 %v39, 92
  %v775 = vpop.permute.xlu0 %774
  %776 = vrot.lane.b32.xlu0 %v40, 92
  %v777 = vpop.permute.xlu0 %776
  %778 = vrot.lane.b32.xlu0 %v41, 92
  %v779 = vpop.permute.xlu0 %778
  %780 = vrot.lane.b32.xlu0 %v42, 92
  %v781 = vpop.permute.xlu0 %780
  %782 = vrot.lane.b32.xlu0 %v43, 92
  %v783 = vpop.permute.xlu0 %782
  %784 = vrot.lane.b32.xlu0 %v44, 92
  %v785 = vpop.permute.xlu0 %784
  %vm786 = vcmask 752640
  %v787 = vsel %vm786, %v775, %v777
  %v788 = vsel %vm786, %v777, %v779
  %v789 = vsel %vm786, %v779, %v781
  %v790 = vsel %vm786, %v781, %v783
  %v791 = vsel %vm786, %v783, %v785
  %v793 = vsel %vm72, %v773, 0
  %v796 = vsel %vm76, %v787, 0
  %v799 = vsel %vm76, %v788, 0
  %v802 = vsel %vm76, %v789, 0
  %v805 = vsel %vm76, %v790, 0
  %v808 = vsel %vm76, %v791, 0
  %v811 = vsel %vm76, %v785, 0
  %813 = vmatpush.bf16.msra.mxu0 0
  %814 = vmatpush.bf16.msra.mxu0 0
  %815 = vmatpush.bf16.msra.mxu0 0
  %816 = vmatpush.bf16.msra.mxu0 0
  %817 = vmatpush.bf16.msra.mxu0 0
  %818 = vmatpush.bf16.msra.mxu0 0
  %819 = vmatpush.bf16.msra.mxu0 0
  %820 = vmatpush.bf16.msra.mxu0 %v796
  %821 = vmatmul.bf16.gmra.mxu0 %v793
  %v822 = vpop.f32.mrf.mxu0
  %v823 = vadd.f32 0.0, %v822
  %v824 = vpop.f32.mrf.mxu0
  %825 = vdwg.mxu0
  %826 = vmatpush.bf16.msra.mxu0 0
  %827 = vmatpush.bf16.msra.mxu0 0
  %828 = vmatpush.bf16.msra.mxu0 0
  %829 = vmatpush.bf16.msra.mxu0 0
  %830 = vmatpush.bf16.msra.mxu0 0
  %831 = vmatpush.bf16.msra.mxu0 0
  %832 = vmatpush.bf16.msra.mxu0 0
  %833 = vmatpush.bf16.msra.mxu0 %v799
  %834 = vmatmul.bf16.gmra.mxu0 %v793
  %v835 = vpop.f32.mrf.mxu0
  %v836 = vadd.f32 0.0, %v835
  %v837 = vpop.f32.mrf.mxu0
  %838 = vdwg.mxu0
  %839 = vmatpush.bf16.msra.mxu0 0
  %840 = vmatpush.bf16.msra.mxu0 0
  %841 = vmatpush.bf16.msra.mxu0 0
  %842 = vmatpush.bf16.msra.mxu0 0
  %843 = vmatpush.bf16.msra.mxu0 0
  %844 = vmatpush.bf16.msra.mxu0 0
  %845 = vmatpush.bf16.msra.mxu0 0
  %846 = vmatpush.bf16.msra.mxu0 %v802
  %847 = vmatmul.bf16.gmra.mxu0 %v793
  %v848 = vpop.f32.mrf.mxu0
  %v849 = vadd.f32 0.0, %v848
  %v850 = vpop.f32.mrf.mxu0
  %851 = vdwg.mxu0
  %852 = vmatpush.bf16.msra.mxu0 0
  %853 = vmatpush.bf16.msra.mxu0 0
  %854 = vmatpush.bf16.msra.mxu0 0
  %855 = vmatpush.bf16.msra.mxu0 0
  %856 = vmatpush.bf16.msra.mxu0 0
  %857 = vmatpush.bf16.msra.mxu0 0
  %858 = vmatpush.bf16.msra.mxu0 0
  %859 = vmatpush.bf16.msra.mxu0 %v805
  %860 = vmatmul.bf16.gmra.mxu0 %v793
  %v861 = vpop.f32.mrf.mxu0
  %v862 = vadd.f32 0.0, %v861
  %v863 = vpop.f32.mrf.mxu0
  %864 = vdwg.mxu0
  %865 = vmatpush.bf16.msra.mxu0 0
  %866 = vmatpush.bf16.msra.mxu0 0
  %867 = vmatpush.bf16.msra.mxu0 0
  %868 = vmatpush.bf16.msra.mxu0 0
  %869 = vmatpush.bf16.msra.mxu0 0
  %870 = vmatpush.bf16.msra.mxu0 0
  %871 = vmatpush.bf16.msra.mxu0 0
  %872 = vmatpush.bf16.msra.mxu0 %v808
  %873 = vmatmul.bf16.gmra.mxu0 %v793
  %v874 = vpop.f32.mrf.mxu0
  %v875 = vadd.f32 0.0, %v874
  %v876 = vpop.f32.mrf.mxu0
  %877 = vdwg.mxu0
  %878 = vmatpush.bf16.msra.mxu0 0
  %879 = vmatpush.bf16.msra.mxu0 0
  %880 = vmatpush.bf16.msra.mxu0 0
  %881 = vmatpush.bf16.msra.mxu0 0
  %882 = vmatpush.bf16.msra.mxu0 0
  %883 = vmatpush.bf16.msra.mxu0 0
  %884 = vmatpush.bf16.msra.mxu0 0
  %885 = vmatpush.bf16.msra.mxu0 %v811
  %886 = vmatmul.bf16.gmra.mxu0 %v793
  %v887 = vpop.f32.mrf.mxu0
  %v888 = vadd.f32 0.0, %v887
  %v889 = vpop.f32.mrf.mxu0
  %890 = vdwg.mxu0
  %v891 = vadd.f32 %v766, %v823
  %v892 = vadd.f32 %v767, %v836
  %v893 = vadd.f32 %v768, %v849
  %v894 = vadd.f32 %v769, %v862
  %v895 = vadd.f32 %v770, %v875
  %v896 = vadd.f32 %v771, %v888
  %s897 = scalar_lea.vmem %s1, 28
  %v898 = vld [vmem:[%s897] sm:$0xf]
  %899 = vrot.lane.b32.xlu0 %v39, 91
  %v900 = vpop.permute.xlu0 %899
  %901 = vrot.lane.b32.xlu0 %v40, 91
  %v902 = vpop.permute.xlu0 %901
  %903 = vrot.lane.b32.xlu0 %v41, 91
  %v904 = vpop.permute.xlu0 %903
  %905 = vrot.lane.b32.xlu0 %v42, 91
  %v906 = vpop.permute.xlu0 %905
  %907 = vrot.lane.b32.xlu0 %v43, 91
  %v908 = vpop.permute.xlu0 %907
  %909 = vrot.lane.b32.xlu0 %v44, 91
  %v910 = vpop.permute.xlu0 %909
  %vm911 = vcmask 744448
  %v912 = vsel %vm911, %v900, %v902
  %v913 = vsel %vm911, %v902, %v904
  %v914 = vsel %vm911, %v904, %v906
  %v915 = vsel %vm911, %v906, %v908
  %v916 = vsel %vm911, %v908, %v910
  %v918 = vsel %vm72, %v898, 0
  %v921 = vsel %vm76, %v912, 0
  %v924 = vsel %vm76, %v913, 0
  %v927 = vsel %vm76, %v914, 0
  %v930 = vsel %vm76, %v915, 0
  %v933 = vsel %vm76, %v916, 0
  %v936 = vsel %vm76, %v910, 0
  %938 = vmatpush.bf16.msra.mxu0 0
  %939 = vmatpush.bf16.msra.mxu0 0
  %940 = vmatpush.bf16.msra.mxu0 0
  %941 = vmatpush.bf16.msra.mxu0 0
  %942 = vmatpush.bf16.msra.mxu0 0
  %943 = vmatpush.bf16.msra.mxu0 0
  %944 = vmatpush.bf16.msra.mxu0 0
  %945 = vmatpush.bf16.msra.mxu0 %v921
  %946 = vmatmul.bf16.gmra.mxu0 %v918
  %v947 = vpop.f32.mrf.mxu0
  %v948 = vadd.f32 0.0, %v947
  %v949 = vpop.f32.mrf.mxu0
  %950 = vdwg.mxu0
  %951 = vmatpush.bf16.msra.mxu0 0
  %952 = vmatpush.bf16.msra.mxu0 0
  %953 = vmatpush.bf16.msra.mxu0 0
  %954 = vmatpush.bf16.msra.mxu0 0
  %955 = vmatpush.bf16.msra.mxu0 0
  %956 = vmatpush.bf16.msra.mxu0 0
  %957 = vmatpush.bf16.msra.mxu0 0
  %958 = vmatpush.bf16.msra.mxu0 %v924
  %959 = vmatmul.bf16.gmra.mxu0 %v918
  %v960 = vpop.f32.mrf.mxu0
  %v961 = vadd.f32 0.0, %v960
  %v962 = vpop.f32.mrf.mxu0
  %963 = vdwg.mxu0
  %964 = vmatpush.bf16.msra.mxu0 0
  %965 = vmatpush.bf16.msra.mxu0 0
  %966 = vmatpush.bf16.msra.mxu0 0
  %967 = vmatpush.bf16.msra.mxu0 0
  %968 = vmatpush.bf16.msra.mxu0 0
  %969 = vmatpush.bf16.msra.mxu0 0
  %970 = vmatpush.bf16.msra.mxu0 0
  %971 = vmatpush.bf16.msra.mxu0 %v927
  %972 = vmatmul.bf16.gmra.mxu0 %v918
  %v973 = vpop.f32.mrf.mxu0
  %v974 = vadd.f32 0.0, %v973
  %v975 = vpop.f32.mrf.mxu0
  %976 = vdwg.mxu0
  %977 = vmatpush.bf16.msra.mxu0 0
  %978 = vmatpush.bf16.msra.mxu0 0
  %979 = vmatpush.bf16.msra.mxu0 0
  %980 = vmatpush.bf16.msra.mxu0 0
  %981 = vmatpush.bf16.msra.mxu0 0
  %982 = vmatpush.bf16.msra.mxu0 0
  %983 = vmatpush.bf16.msra.mxu0 0
  %984 = vmatpush.bf16.msra.mxu0 %v930
  %985 = vmatmul.bf16.gmra.mxu0 %v918
  %v986 = vpop.f32.mrf.mxu0
  %v987 = vadd.f32 0.0, %v986
  %v988 = vpop.f32.mrf.mxu0
  %989 = vdwg.mxu0
  %990 = vmatpush.bf16.msra.mxu0 0
  %991 = vmatpush.bf16.msra.mxu0 0
  %992 = vmatpush.bf16.msra.mxu0 0
  %993 = vmatpush.bf16.msra.mxu0 0
  %994 = vmatpush.bf16.msra.mxu0 0
  %995 = vmatpush.bf16.msra.mxu0 0
  %996 = vmatpush.bf16.msra.mxu0 0
  %997 = vmatpush.bf16.msra.mxu0 %v933
  %998 = vmatmul.bf16.gmra.mxu0 %v918
  %v999 = vpop.f32.mrf.mxu0
  %v1000 = vadd.f32 0.0, %v999
  %v1001 = vpop.f32.mrf.mxu0
  %1002 = vdwg.mxu0
  %1003 = vmatpush.bf16.msra.mxu0 0
  %1004 = vmatpush.bf16.msra.mxu0 0
  %1005 = vmatpush.bf16.msra.mxu0 0
  %1006 = vmatpush.bf16.msra.mxu0 0
  %1007 = vmatpush.bf16.msra.mxu0 0
  %1008 = vmatpush.bf16.msra.mxu0 0
  %1009 = vmatpush.bf16.msra.mxu0 0
  %1010 = vmatpush.bf16.msra.mxu0 %v936
  %1011 = vmatmul.bf16.gmra.mxu0 %v918
  %v1012 = vpop.f32.mrf.mxu0
  %v1013 = vadd.f32 0.0, %v1012
  %v1014 = vpop.f32.mrf.mxu0
  %1015 = vdwg.mxu0
  %v1016 = vadd.f32 %v891, %v948
  %v1017 = vadd.f32 %v892, %v961
  %v1018 = vadd.f32 %v893, %v974
  %v1019 = vadd.f32 %v894, %v987
  %v1020 = vadd.f32 %v895, %v1000
  %v1021 = vadd.f32 %v896, %v1013
  %s1022 = scalar_lea.vmem %s1, 32
  %v1023 = vld [vmem:[%s1022] sm:$0xf]
  %1024 = vrot.lane.b32.xlu0 %v39, 90
  %v1025 = vpop.permute.xlu0 %1024
  %1026 = vrot.lane.b32.xlu0 %v40, 90
  %v1027 = vpop.permute.xlu0 %1026
  %1028 = vrot.lane.b32.xlu0 %v41, 90
  %v1029 = vpop.permute.xlu0 %1028
  %1030 = vrot.lane.b32.xlu0 %v42, 90
  %v1031 = vpop.permute.xlu0 %1030
  %1032 = vrot.lane.b32.xlu0 %v43, 90
  %v1033 = vpop.permute.xlu0 %1032
  %1034 = vrot.lane.b32.xlu0 %v44, 90
  %v1035 = vpop.permute.xlu0 %1034
  %vm1036 = vcmask 736256
  %v1037 = vsel %vm1036, %v1025, %v1027
  %v1038 = vsel %vm1036, %v1027, %v1029
  %v1039 = vsel %vm1036, %v1029, %v1031
  %v1040 = vsel %vm1036, %v1031, %v1033
  %v1041 = vsel %vm1036, %v1033, %v1035
  %v1043 = vsel %vm72, %v1023, 0
  %v1046 = vsel %vm76, %v1037, 0
  %v1049 = vsel %vm76, %v1038, 0
  %v1052 = vsel %vm76, %v1039, 0
  %v1055 = vsel %vm76, %v1040, 0
  %v1058 = vsel %vm76, %v1041, 0
  %v1061 = vsel %vm76, %v1035, 0
  %1063 = vmatpush.bf16.msra.mxu0 0
  %1064 = vmatpush.bf16.msra.mxu0 0
  %1065 = vmatpush.bf16.msra.mxu0 0
  %1066 = vmatpush.bf16.msra.mxu0 0
  %1067 = vmatpush.bf16.msra.mxu0 0
  %1068 = vmatpush.bf16.msra.mxu0 0
  %1069 = vmatpush.bf16.msra.mxu0 0
  %1070 = vmatpush.bf16.msra.mxu0 %v1046
  %1071 = vmatmul.bf16.gmra.mxu0 %v1043
  %v1072 = vpop.f32.mrf.mxu0
  %v1073 = vadd.f32 0.0, %v1072
  %v1074 = vpop.f32.mrf.mxu0
  %1075 = vdwg.mxu0
  %1076 = vmatpush.bf16.msra.mxu0 0
  %1077 = vmatpush.bf16.msra.mxu0 0
  %1078 = vmatpush.bf16.msra.mxu0 0
  %1079 = vmatpush.bf16.msra.mxu0 0
  %1080 = vmatpush.bf16.msra.mxu0 0
  %1081 = vmatpush.bf16.msra.mxu0 0
  %1082 = vmatpush.bf16.msra.mxu0 0
  %1083 = vmatpush.bf16.msra.mxu0 %v1049
  %1084 = vmatmul.bf16.gmra.mxu0 %v1043
  %v1085 = vpop.f32.mrf.mxu0
  %v1086 = vadd.f32 0.0, %v1085
  %v1087 = vpop.f32.mrf.mxu0
  %1088 = vdwg.mxu0
  %1089 = vmatpush.bf16.msra.mxu0 0
  %1090 = vmatpush.bf16.msra.mxu0 0
  %1091 = vmatpush.bf16.msra.mxu0 0
  %1092 = vmatpush.bf16.msra.mxu0 0
  %1093 = vmatpush.bf16.msra.mxu0 0
  %1094 = vmatpush.bf16.msra.mxu0 0
  %1095 = vmatpush.bf16.msra.mxu0 0
  %1096 = vmatpush.bf16.msra.mxu0 %v1052
  %1097 = vmatmul.bf16.gmra.mxu0 %v1043
  %v1098 = vpop.f32.mrf.mxu0
  %v1099 = vadd.f32 0.0, %v1098
  %v1100 = vpop.f32.mrf.mxu0
  %1101 = vdwg.mxu0
  %1102 = vmatpush.bf16.msra.mxu0 0
  %1103 = vmatpush.bf16.msra.mxu0 0
  %1104 = vmatpush.bf16.msra.mxu0 0
  %1105 = vmatpush.bf16.msra.mxu0 0
  %1106 = vmatpush.bf16.msra.mxu0 0
  %1107 = vmatpush.bf16.msra.mxu0 0
  %1108 = vmatpush.bf16.msra.mxu0 0
  %1109 = vmatpush.bf16.msra.mxu0 %v1055
  %1110 = vmatmul.bf16.gmra.mxu0 %v1043
  %v1111 = vpop.f32.mrf.mxu0
  %v1112 = vadd.f32 0.0, %v1111
  %v1113 = vpop.f32.mrf.mxu0
  %1114 = vdwg.mxu0
  %1115 = vmatpush.bf16.msra.mxu0 0
  %1116 = vmatpush.bf16.msra.mxu0 0
  %1117 = vmatpush.bf16.msra.mxu0 0
  %1118 = vmatpush.bf16.msra.mxu0 0
  %1119 = vmatpush.bf16.msra.mxu0 0
  %1120 = vmatpush.bf16.msra.mxu0 0
  %1121 = vmatpush.bf16.msra.mxu0 0
  %1122 = vmatpush.bf16.msra.mxu0 %v1058
  %1123 = vmatmul.bf16.gmra.mxu0 %v1043
  %v1124 = vpop.f32.mrf.mxu0
  %v1125 = vadd.f32 0.0, %v1124
  %v1126 = vpop.f32.mrf.mxu0
  %1127 = vdwg.mxu0
  %1128 = vmatpush.bf16.msra.mxu0 0
  %1129 = vmatpush.bf16.msra.mxu0 0
  %1130 = vmatpush.bf16.msra.mxu0 0
  %1131 = vmatpush.bf16.msra.mxu0 0
  %1132 = vmatpush.bf16.msra.mxu0 0
  %1133 = vmatpush.bf16.msra.mxu0 0
  %1134 = vmatpush.bf16.msra.mxu0 0
  %1135 = vmatpush.bf16.msra.mxu0 %v1061
  %1136 = vmatmul.bf16.gmra.mxu0 %v1043
  %v1137 = vpop.f32.mrf.mxu0
  %v1138 = vadd.f32 0.0, %v1137
  %v1139 = vpop.f32.mrf.mxu0
  %1140 = vdwg.mxu0
  %v1141 = vadd.f32 %v1016, %v1073
  %v1142 = vadd.f32 %v1017, %v1086
  %v1143 = vadd.f32 %v1018, %v1099
  %v1144 = vadd.f32 %v1019, %v1112
  %v1145 = vadd.f32 %v1020, %v1125
  %v1146 = vadd.f32 %v1021, %v1138
  %v1147 = vld [vmem:[%s2] sm:$0xff]
  %1149 = vset.pattern.permute.xlu0 0
  %1150 = vperm.xlu0 %1149, %v1147
  %v1151 = vpop.permute.xlu0 %1150
  %v1153 = vadd.f32 %v1141, %v1151
  %v1154 = vadd.f32 %v1142, %v1151
  %v1155 = vadd.f32 %v1143, %v1151
  %v1156 = vadd.f32 %v1144, %v1151
  %v1157 = vadd.f32 %v1145, %v1151
  %v1158 = vadd.f32 %v1146, %v1151
  %v1159 = vmax.f32 %v1153, 0.0
  %v1160 = vmax.f32 %v1154, 0.0
  %v1161 = vmax.f32 %v1155, 0.0
  %v1162 = vmax.f32 %v1156, 0.0
  %v1163 = vmax.f32 %v1157, 0.0
  %v1164 = vmax.f32 %v1158, 0.0
  %1165 = vst [vmem:[#allocation2] sm:$0xff] %v1159
  %1166 = vst [vmem:[#allocation2 + $0x8] sm:$0xff] %v1160
  %1167 = vst [vmem:[#allocation2 + $0x10] sm:$0xff] %v1161
  %1168 = vst [vmem:[#allocation2 + $0x18] sm:$0xff] %v1162
  %1169 = vst [vmem:[#allocation2 + $0x20] sm:$0xff] %v1163
  %1170 = vst.msk [vmem:[#allocation2 + $0x28] sm:$0xff] %vm72, %v1164
  %v1171 = vld [vmem:[#allocation2] sm:$0xff]
  %v1172 = vld [vmem:[#allocation2 + $0x8] sm:$0xff]
  %v1173 = vld [vmem:[#allocation2 + $0x10] sm:$0xff]
  %v1174 = vld [vmem:[#allocation2 + $0x18] sm:$0xff]
  %v1175 = vld [vmem:[#allocation2 + $0x20] sm:$0xff]
  %1181 = vrot.lane.b32.xlu0 %v1171, 127
  %v1182 = vpop.permute.xlu0 %1181
  %1183 = vrot.lane.b32.xlu0 %v1172, 127
  %v1184 = vpop.permute.xlu0 %1183
  %1185 = vrot.lane.b32.xlu0 %v1173, 127
  %v1186 = vpop.permute.xlu0 %1185
  %1187 = vrot.lane.b32.xlu0 %v1174, 127
  %v1188 = vpop.permute.xlu0 %1187
  %1189 = vrot.lane.b32.xlu0 %v1175, 127
  %v1190 = vpop.permute.xlu0 %1189
  %vm1191 = vcmask 1039360
  %v1192 = vsel %vm1191, %v1182, %v1184
  %v1193 = vsel %vm1191, %v1184, %v1186
  %v1194 = vsel %vm1191, %v1186, %v1188
  %v1195 = vsel %vm1191, %v1188, %v1190
  %v1201 = vmax.f32 %v1171, %v1192
  %v1202 = vmax.f32 %v1172, %v1193
  %v1203 = vmax.f32 %v1173, %v1194
  %v1204 = vmax.f32 %v1174, %v1195
  %v1205 = vmax.f32 %v1175, %v1190
  %v1206 = vld [vmem:[#allocation2 + $0x28] sm:$0xff]
  %1208 = vrot.lane.b32.xlu0 %v1206, 127
  %v1209 = vpop.permute.xlu0 %1208
  %v1210 = vsel %vm1191, %v1190, %v1209
  %v1213 = vmax.f32 %v1175, %v1210
  %v1214 = vmax.f32 %v1206, %v1209
  %1221 = vrot.lane.b32.xlu0 %v1201, 110
  %v1222 = vpop.permute.xlu0 %1221
  %1223 = vrot.lane.b32.xlu0 %v1202, 110
  %v1224 = vpop.permute.xlu0 %1223
  %1225 = vrot.lane.b32.xlu0 %v1203, 110
  %v1226 = vpop.permute.xlu0 %1225
  %1227 = vrot.lane.b32.xlu0 %v1204, 110
  %v1228 = vpop.permute.xlu0 %1227
  %1229 = vrot.lane.b32.xlu0 %v1213, 110
  %v1230 = vpop.permute.xlu0 %1229
  %1231 = vrot.lane.b32.xlu0 %v1214, 110
  %v1232 = vpop.permute.xlu0 %1231
  %vm1233 = vcmask 900096
  %v1234 = vsel %vm1233, %v1222, %v1224
  %v1235 = vsel %vm1233, %v1224, %v1226
  %v1236 = vsel %vm1233, %v1226, %v1228
  %v1237 = vsel %vm1233, %v1228, %v1230
  %v1238 = vsel %vm1233, %v1230, %v1232
  %v1244 = vmax.f32 %v1201, %v1234
  %v1245 = vmax.f32 %v1202, %v1235
  %v1246 = vmax.f32 %v1203, %v1236
  %v1247 = vmax.f32 %v1204, %v1237
  %v1248 = vmax.f32 %v1205, %v1238
  %v1249 = vpack.c.bf16 %v1244, %v1244
  %v1250 = vpack.c.bf16 %v1245, %v1245
  %v1251 = vpack.c.bf16 %v1246, %v1246
  %v1252 = vpack.c.bf16 %v1247, %v1247
  %v1253 = vpack.c.bf16 %v1248, %v1248
  %v1254 = vld [vmem:[%s3] sm:$0xff]
  %v1255 = vld [vmem:[%s3 + $0x8] sm:$0xff]
  %v1256 = vld [vmem:[%s3 + $0x10] sm:$0xff]
  %v1257 = vld [vmem:[%s3 + $0x18] sm:$0xff]
  %v1258 = vld [vmem:[%s3 + $0x20] sm:$0xff]
  %v1259 = vld [vmem:[%s3 + $0x28] sm:$0xff]
  %v1260 = vld [vmem:[%s3 + $0x30] sm:$0xff]
  %v1261 = vld [vmem:[%s3 + $0x38] sm:$0xff]
  %v1262 = vld [vmem:[%s3 + $0x40] sm:$0xff]
  %v1263 = vld [vmem:[%s3 + $0x48] sm:$0xff]
  %v1264 = vld [vmem:[%s3 + $0x50] sm:$0xff]
  %v1265 = vld [vmem:[%s3 + $0x58] sm:$0xff]
  %v1266 = vld [vmem:[%s3 + $0x60] sm:$0xff]
  %v1267 = vld [vmem:[%s3 + $0x68] sm:$0xff]
  %v1268 = vld [vmem:[%s3 + $0x70] sm:$0xff]
  %v1269 = vld [vmem:[%s3 + $0x78] sm:$0xff]
  %v1270 = vld [vmem:[%s3 + $0x80] sm:$0xff]
  %v1271 = vld [vmem:[%s3 + $0x88] sm:$0xff]
  %v1272 = vld [vmem:[%s3 + $0x90] sm:$0xff]
  %v1273 = vld [vmem:[%s3 + $0x98] sm:$0xff]
  %v1274 = vld [vmem:[%s3 + $0xa0] sm:$0xff]
  %v1275 = vld [vmem:[%s3 + $0xa8] sm:$0xff]
  %v1276 = vld [vmem:[%s3 + $0xb0] sm:$0xff]
  %v1277 = vld [vmem:[%s3 + $0xb8] sm:$0xff]
  %v1278 = vld [vmem:[%s3 + $0xc0] sm:$0xff]
  %v1279 = vld [vmem:[%s3 + $0xc8] sm:$0xff]
  %v1280 = vld [vmem:[%s3 + $0xd0] sm:$0xff]
  %v1281 = vld [vmem:[%s3 + $0xd8] sm:$0xff]
  %v1282 = vld [vmem:[%s3 + $0xe0] sm:$0xff]
  %v1283 = vld [vmem:[%s3 + $0xe8] sm:$0xff]
  %v1284 = vld [vmem:[%s3 + $0xf0] sm:$0xff]
  %v1285 = vld [vmem:[%s3 + $0xf8] sm:$0xff]
  %v1286 = vld [vmem:[%s3 + $0x100] sm:$0xff]
  %v1287 = vld [vmem:[%s3 + $0x108] sm:$0xff]
  %v1288 = vld [vmem:[%s3 + $0x110] sm:$0xff]
  %v1289 = vld [vmem:[%s3 + $0x118] sm:$0xff]
  %v1290 = vld [vmem:[%s3 + $0x120] sm:$0xff]
  %v1291 = vld [vmem:[%s3 + $0x128] sm:$0xff]
  %v1292 = vld [vmem:[%s3 + $0x130] sm:$0xff]
  %v1293 = vld [vmem:[%s3 + $0x138] sm:$0xff]
  %v1294 = vld [vmem:[%s3 + $0x140] sm:$0xff]
  %v1295 = vld [vmem:[%s3 + $0x148] sm:$0xff]
  %v1296 = vld [vmem:[%s3 + $0x150] sm:$0xff]
  %v1297 = vld [vmem:[%s3 + $0x158] sm:$0xff]
  %v1298 = vld [vmem:[%s3 + $0x160] sm:$0xff]
  %v1299 = vld [vmem:[%s3 + $0x168] sm:$0xff]
  %v1300 = vld [vmem:[%s3 + $0x170] sm:$0xff]
  %v1301 = vld [vmem:[%s3 + $0x178] sm:$0xff]
  %v1302 = vld [vmem:[%s3 + $0x180] sm:$0xff]
  %v1303 = vld [vmem:[%s3 + $0x188] sm:$0xff]
  %v1304 = vld [vmem:[%s3 + $0x190] sm:$0xff]
  %v1305 = vld [vmem:[%s3 + $0x198] sm:$0xff]
  %v1306 = vld [vmem:[%s3 + $0x1a0] sm:$0xff]
  %v1307 = vld [vmem:[%s3 + $0x1a8] sm:$0xff]
  %v1308 = vld [vmem:[%s3 + $0x1b0] sm:$0xff]
  %v1309 = vld [vmem:[%s3 + $0x1b8] sm:$0xff]
  %v1310 = vld [vmem:[%s3 + $0x1c0] sm:$0xff]
  %v1311 = vld [vmem:[%s3 + $0x1c8] sm:$0xff]
  %v1312 = vld [vmem:[%s3 + $0x1d0] sm:$0xff]
  %v1313 = vld [vmem:[%s3 + $0x1d8] sm:$0xff]
  %v1314 = vld [vmem:[%s3 + $0x1e0] sm:$0xff]
  %v1315 = vld [vmem:[%s3 + $0x1e8] sm:$0xff]
  %v1316 = vld [vmem:[%s3 + $0x1f0] sm:$0xff]
  %v1317 = vld [vmem:[%s3 + $0x1f8] sm:$0xff]
  %v1318 = vld [vmem:[%s3 + $0x200] sm:$0xff]
  %v1319 = vld [vmem:[%s3 + $0x208] sm:$0xff]
  %v1320 = vld [vmem:[%s3 + $0x210] sm:$0xff]
  %v1321 = vld [vmem:[%s3 + $0x218] sm:$0xff]
  %v1322 = vld [vmem:[%s3 + $0x220] sm:$0xff]
  %v1323 = vld [vmem:[%s3 + $0x228] sm:$0xff]
  %v1324 = vld [vmem:[%s3 + $0x230] sm:$0xff]
  %v1325 = vld [vmem:[%s3 + $0x238] sm:$0xff]
  %v1326 = vld [vmem:[%s3 + $0x240] sm:$0xff]
  %v1327 = vld [vmem:[%s3 + $0x248] sm:$0xff]
  %v1328 = vld [vmem:[%s3 + $0x250] sm:$0xff]
  %v1329 = vld [vmem:[%s3 + $0x258] sm:$0xff]
  %v1330 = vld [vmem:[%s3 + $0x260] sm:$0xff]
  %v1331 = vld [vmem:[%s3 + $0x268] sm:$0xff]
  %v1332 = vld [vmem:[%s3 + $0x270] sm:$0x77]
  %v1412 = vunpack.c.l.b16 %v1254
  %v1413 = vunpack.c.h.b16 %v1254
  %v1414 = vunpack.c.l.b16 %v1255
  %v1415 = vunpack.c.h.b16 %v1255
  %v1416 = vunpack.c.l.b16 %v1256
  %v1417 = vunpack.c.h.b16 %v1256
  %v1418 = vunpack.c.l.b16 %v1257
  %v1419 = vunpack.c.h.b16 %v1257
  %v1420 = vunpack.c.l.b16 %v1258
  %v1421 = vunpack.c.h.b16 %v1258
  %v1422 = vunpack.c.l.b16 %v1259
  %v1423 = vunpack.c.h.b16 %v1259
  %v1424 = vunpack.c.l.b16 %v1260
  %v1425 = vunpack.c.h.b16 %v1260
  %v1426 = vunpack.c.l.b16 %v1261
  %v1427 = vunpack.c.h.b16 %v1261
  %v1428 = vunpack.c.l.b16 %v1262
  %v1429 = vunpack.c.h.b16 %v1262
  %v1430 = vunpack.c.l.b16 %v1263
  %v1431 = vunpack.c.h.b16 %v1263
  %v1432 = vunpack.c.l.b16 %v1264
  %v1433 = vunpack.c.h.b16 %v1264
  %v1434 = vunpack.c.l.b16 %v1265
  %v1435 = vunpack.c.h.b16 %v1265
  %v1436 = vunpack.c.l.b16 %v1266
  %v1437 = vunpack.c.h.b16 %v1266
  %v1438 = vunpack.c.l.b16 %v1267
  %v1439 = vunpack.c.h.b16 %v1267
  %v1440 = vunpack.c.l.b16 %v1268
  %v1441 = vunpack.c.h.b16 %v1268
  %v1442 = vunpack.c.l.b16 %v1269
  %v1443 = vunpack.c.h.b16 %v1269
  %v1444 = vunpack.c.l.b16 %v1270
  %v1445 = vunpack.c.h.b16 %v1270
  %v1446 = vunpack.c.l.b16 %v1271
  %v1447 = vunpack.c.h.b16 %v1271
  %v1448 = vunpack.c.l.b16 %v1272
  %v1449 = vunpack.c.h.b16 %v1272
  %v1450 = vunpack.c.l.b16 %v1273
  %v1451 = vunpack.c.h.b16 %v1273
  %v1452 = vunpack.c.l.b16 %v1274
  %v1453 = vunpack.c.h.b16 %v1274
  %v1454 = vunpack.c.l.b16 %v1275
  %v1455 = vunpack.c.h.b16 %v1275
  %v1456 = vunpack.c.l.b16 %v1276
  %v1457 = vunpack.c.h.b16 %v1276
  %v1458 = vunpack.c.l.b16 %v1277
  %v1459 = vunpack.c.h.b16 %v1277
  %v1460 = vunpack.c.l.b16 %v1278
  %v1461 = vunpack.c.h.b16 %v1278
  %v1462 = vunpack.c.l.b16 %v1279
  %v1463 = vunpack.c.h.b16 %v1279
  %v1464 = vunpack.c.l.b16 %v1280
  %v1465 = vunpack.c.h.b16 %v1280
  %v1466 = vunpack.c.l.b16 %v1281
  %v1467 = vunpack.c.h.b16 %v1281
  %v1468 = vunpack.c.l.b16 %v1282
  %v1469 = vunpack.c.h.b16 %v1282
  %v1470 = vunpack.c.l.b16 %v1283
  %v1471 = vunpack.c.h.b16 %v1283
  %v1472 = vunpack.c.l.b16 %v1284
  %v1473 = vunpack.c.h.b16 %v1284
  %v1474 = vunpack.c.l.b16 %v1285
  %v1475 = vunpack.c.h.b16 %v1285
  %v1476 = vunpack.c.l.b16 %v1286
  %v1477 = vunpack.c.h.b16 %v1286
  %v1478 = vunpack.c.l.b16 %v1287
  %v1479 = vunpack.c.h.b16 %v1287
  %v1480 = vunpack.c.l.b16 %v1288
  %v1481 = vunpack.c.h.b16 %v1288
  %v1482 = vunpack.c.l.b16 %v1289
  %v1483 = vunpack.c.h.b16 %v1289
  %v1484 = vunpack.c.l.b16 %v1290
  %v1485 = vunpack.c.h.b16 %v1290
  %v1486 = vunpack.c.l.b16 %v1291
  %v1487 = vunpack.c.h.b16 %v1291
  %v1488 = vunpack.c.l.b16 %v1292
  %v1489 = vunpack.c.h.b16 %v1292
  %v1490 = vunpack.c.l.b16 %v1293
  %v1491 = vunpack.c.h.b16 %v1293
  %v1492 = vunpack.c.l.b16 %v1294
  %v1493 = vunpack.c.h.b16 %v1294
  %v1494 = vunpack.c.l.b16 %v1295
  %v1495 = vunpack.c.h.b16 %v1295
  %v1496 = vunpack.c.l.b16 %v1296
  %v1497 = vunpack.c.h.b16 %v1296
  %v1498 = vunpack.c.l.b16 %v1297
  %v1499 = vunpack.c.h.b16 %v1297
  %v1500 = vunpack.c.l.b16 %v1298
  %v1501 = vunpack.c.h.b16 %v1298
  %v1502 = vunpack.c.l.b16 %v1299
  %v1503 = vunpack.c.h.b16 %v1299
  %v1504 = vunpack.c.l.b16 %v1300
  %v1505 = vunpack.c.h.b16 %v1300
  %v1506 = vunpack.c.l.b16 %v1301
  %v1507 = vunpack.c.h.b16 %v1301
  %v1508 = vunpack.c.l.b16 %v1302
  %v1509 = vunpack.c.h.b16 %v1302
  %v1510 = vunpack.c.l.b16 %v1303
  %v1511 = vunpack.c.h.b16 %v1303
  %v1512 = vunpack.c.l.b16 %v1304
  %v1513 = vunpack.c.h.b16 %v1304
  %v1514 = vunpack.c.l.b16 %v1305
  %v1515 = vunpack.c.h.b16 %v1305
  %v1516 = vunpack.c.l.b16 %v1306
  %v1517 = vunpack.c.h.b16 %v1306
  %v1518 = vunpack.c.l.b16 %v1307
  %v1519 = vunpack.c.h.b16 %v1307
  %v1520 = vunpack.c.l.b16 %v1308
  %v1521 = vunpack.c.h.b16 %v1308
  %v1522 = vunpack.c.l.b16 %v1309
  %v1523 = vunpack.c.h.b16 %v1309
  %v1524 = vunpack.c.l.b16 %v1310
  %v1525 = vunpack.c.h.b16 %v1310
  %v1526 = vunpack.c.l.b16 %v1311
  %v1527 = vunpack.c.h.b16 %v1311
  %v1528 = vunpack.c.l.b16 %v1312
  %v1529 = vunpack.c.h.b16 %v1312
  %v1530 = vunpack.c.l.b16 %v1313
  %v1531 = vunpack.c.h.b16 %v1313
  %v1532 = vunpack.c.l.b16 %v1314
  %v1533 = vunpack.c.h.b16 %v1314
  %v1534 = vunpack.c.l.b16 %v1315
  %v1535 = vunpack.c.h.b16 %v1315
  %v1536 = vunpack.c.l.b16 %v1316
  %v1537 = vunpack.c.h.b16 %v1316
  %v1538 = vunpack.c.l.b16 %v1317
  %v1539 = vunpack.c.h.b16 %v1317
  %v1540 = vunpack.c.l.b16 %v1318
  %v1541 = vunpack.c.h.b16 %v1318
  %v1542 = vunpack.c.l.b16 %v1319
  %v1543 = vunpack.c.h.b16 %v1319
  %v1544 = vunpack.c.l.b16 %v1320
  %v1545 = vunpack.c.h.b16 %v1320
  %v1546 = vunpack.c.l.b16 %v1321
  %v1547 = vunpack.c.h.b16 %v1321
  %v1548 = vunpack.c.l.b16 %v1322
  %v1549 = vunpack.c.h.b16 %v1322
  %v1550 = vunpack.c.l.b16 %v1323
  %v1551 = vunpack.c.h.b16 %v1323
  %v1552 = vunpack.c.l.b16 %v1324
  %v1553 = vunpack.c.h.b16 %v1324
  %v1554 = vunpack.c.l.b16 %v1325
  %v1555 = vunpack.c.h.b16 %v1325
  %v1556 = vunpack.c.l.b16 %v1326
  %v1557 = vunpack.c.h.b16 %v1326
  %v1558 = vunpack.c.l.b16 %v1327
  %v1559 = vunpack.c.h.b16 %v1327
  %v1560 = vunpack.c.l.b16 %v1328
  %v1561 = vunpack.c.h.b16 %v1328
  %v1562 = vunpack.c.l.b16 %v1329
  %v1563 = vunpack.c.h.b16 %v1329
  %v1564 = vunpack.c.l.b16 %v1330
  %v1565 = vunpack.c.h.b16 %v1330
  %v1566 = vunpack.c.l.b16 %v1331
  %v1567 = vunpack.c.h.b16 %v1331
  %v1568 = vunpack.c.l.b16 %v1332
  %v1569 = vunpack.c.h.b16 %v1332
  %v1570 = vpack.c.b16 %v1414, %v1412
  %v1571 = vpack.c.b16 %v1415, %v1413
  %v1572 = vpack.c.b16 %v1418, %v1416
  %v1573 = vpack.c.b16 %v1419, %v1417
  %v1574 = vpack.c.b16 %v1422, %v1420
  %v1575 = vpack.c.b16 %v1423, %v1421
  %v1576 = vpack.c.b16 %v1426, %v1424
  %v1577 = vpack.c.b16 %v1427, %v1425
  %v1578 = vpack.c.b16 %v1430, %v1428
  %v1579 = vpack.c.b16 %v1431, %v1429
  %v1580 = vpack.c.b16 %v1434, %v1432
  %v1581 = vpack.c.b16 %v1435, %v1433
  %v1582 = vpack.c.b16 %v1438, %v1436
  %v1583 = vpack.c.b16 %v1439, %v1437
  %v1584 = vpack.c.b16 %v1442, %v1440
  %v1585 = vpack.c.b16 %v1443, %v1441
  %v1586 = vpack.c.b16 %v1446, %v1444
  %v1587 = vpack.c.b16 %v1447, %v1445
  %v1588 = vpack.c.b16 %v1450, %v1448
  %v1589 = vpack.c.b16 %v1451, %v1449
  %v1590 = vpack.c.b16 %v1454, %v1452
  %v1591 = vpack.c.b16 %v1455, %v1453
  %v1592 = vpack.c.b16 %v1458, %v1456
  %v1593 = vpack.c.b16 %v1459, %v1457
  %v1594 = vpack.c.b16 %v1462, %v1460
  %v1595 = vpack.c.b16 %v1463, %v1461
  %v1596 = vpack.c.b16 %v1466, %v1464
  %v1597 = vpack.c.b16 %v1467, %v1465
  %v1598 = vpack.c.b16 %v1470, %v1468
  %v1599 = vpack.c.b16 %v1471, %v1469
  %v1600 = vpack.c.b16 %v1474, %v1472
  %v1601 = vpack.c.b16 %v1475, %v1473
  %v1602 = vpack.c.b16 %v1478, %v1476
  %v1603 = vpack.c.b16 %v1479, %v1477
  %v1604 = vpack.c.b16 %v1482, %v1480
  %v1605 = vpack.c.b16 %v1483, %v1481
  %v1606 = vpack.c.b16 %v1486, %v1484
  %v1607 = vpack.c.b16 %v1487, %v1485
  %v1608 = vpack.c.b16 %v1490, %v1488
  %v1609 = vpack.c.b16 %v1491, %v1489
  %v1610 = vpack.c.b16 %v1494, %v1492
  %v1611 = vpack.c.b16 %v1495, %v1493
  %v1612 = vpack.c.b16 %v1498, %v1496
  %v1613 = vpack.c.b16 %v1499, %v1497
  %v1614 = vpack.c.b16 %v1502, %v1500
  %v1615 = vpack.c.b16 %v1503, %v1501
  %v1616 = vpack.c.b16 %v1506, %v1504
  %v1617 = vpack.c.b16 %v1507, %v1505
  %v1618 = vpack.c.b16 %v1510, %v1508
  %v1619 = vpack.c.b16 %v1511, %v1509
  %v1620 = vpack.c.b16 %v1514, %v1512
  %v1621 = vpack.c.b16 %v1515, %v1513
  %v1622 = vpack.c.b16 %v1518, %v1516
  %v1623 = vpack.c.b16 %v1519, %v1517
  %v1624 = vpack.c.b16 %v1522, %v1520
  %v1625 = vpack.c.b16 %v1523, %v1521
  %v1626 = vpack.c.b16 %v1526, %v1524
  %v1627 = vpack.c.b16 %v1527, %v1525
  %v1628 = vpack.c.b16 %v1530, %v1528
  %v1629 = vpack.c.b16 %v1531, %v1529
  %v1630 = vpack.c.b16 %v1534, %v1532
  %v1631 = vpack.c.b16 %v1535, %v1533
  %v1632 = vpack.c.b16 %v1538, %v1536
  %v1633 = vpack.c.b16 %v1539, %v1537
  %v1634 = vpack.c.b16 %v1542, %v1540
  %v1635 = vpack.c.b16 %v1543, %v1541
  %v1636 = vpack.c.b16 %v1546, %v1544
  %v1637 = vpack.c.b16 %v1547, %v1545
  %v1638 = vpack.c.b16 %v1550, %v1548
  %v1639 = vpack.c.b16 %v1551, %v1549
  %v1640 = vpack.c.b16 %v1554, %v1552
  %v1641 = vpack.c.b16 %v1555, %v1553
  %v1642 = vpack.c.b16 %v1558, %v1556
  %v1643 = vpack.c.b16 %v1559, %v1557
  %v1644 = vpack.c.b16 %v1562, %v1560
  %v1645 = vpack.c.b16 %v1563, %v1561
  %v1646 = vpack.c.b16 %v1566, %v1564
  %v1647 = vpack.c.b16 %v1567, %v1565
  %v1648 = vpack.c.b16 %v1568, %v1568
  %v1649 = vpack.c.b16 %v1569, %v1569
  %vm1728 = vcmask 957440
  %v1730 = vsel %vm1728, %v1253, 0
  %vm1732 = vcmask 1041408
  %vm1733 = vcmask 1042432
  %v1734 = vsel %vm1732, 4294967295, 65535
  %v1735 = vsel %vm1733, %v1734, 0
  %v1737 = vand.u32 %v1648, %v1735
  %v1740 = vand.u32 %v1649, %v1735
  %1742 = vmatpush.bf16.msra.mxu0 %v1584
  %1743 = vmatpush.bf16.msra.mxu0 %v1582
  %1744 = vmatpush.bf16.msra.mxu0 %v1580
  %1745 = vmatpush.bf16.msra.mxu0 %v1578
  %1746 = vmatpush.bf16.msra.mxu0 %v1576
  %1747 = vmatpush.bf16.msra.mxu0 %v1574
  %1748 = vmatpush.bf16.msra.mxu0 %v1572
  %1749 = vmatpush.bf16.msra.mxu0 %v1570
  %1750 = vmatmul.bf16.gmra.mxu0 %v1249
  %v1751 = vpop.f32.mrf.mxu0
  %v1752 = vadd.f32 0.0, %v1751
  %v1753 = vpop.f32.mrf.mxu0
  %1754 = vdwg.mxu0
  %1755 = vmatpush.bf16.msra.mxu0 %v1600
  %1756 = vmatpush.bf16.msra.mxu0 %v1598
  %1757 = vmatpush.bf16.msra.mxu0 %v1596
  %1758 = vmatpush.bf16.msra.mxu0 %v1594
  %1759 = vmatpush.bf16.msra.mxu0 %v1592
  %1760 = vmatpush.bf16.msra.mxu0 %v1590
  %1761 = vmatpush.bf16.msra.mxu0 %v1588
  %1762 = vmatpush.bf16.msra.mxu0 %v1586
  %1763 = vmatmul.bf16.gmra.mxu0 %v1250
  %v1764 = vpop.f32.mrf.mxu0
  %v1765 = vadd.f32 %v1752, %v1764
  %v1766 = vpop.f32.mrf.mxu0
  %1767 = vdwg.mxu0
  %1768 = vmatpush.bf16.msra.mxu0 %v1616
  %1769 = vmatpush.bf16.msra.mxu0 %v1614
  %1770 = vmatpush.bf16.msra.mxu0 %v1612
  %1771 = vmatpush.bf16.msra.mxu0 %v1610
  %1772 = vmatpush.bf16.msra.mxu0 %v1608
  %1773 = vmatpush.bf16.msra.mxu0 %v1606
  %1774 = vmatpush.bf16.msra.mxu0 %v1604
  %1775 = vmatpush.bf16.msra.mxu0 %v1602
  %1776 = vmatmul.bf16.gmra.mxu0 %v1251
  %v1777 = vpop.f32.mrf.mxu0
  %v1778 = vadd.f32 %v1765, %v1777
  %v1779 = vpop.f32.mrf.mxu0
  %1780 = vdwg.mxu0
  %1781 = vmatpush.bf16.msra.mxu0 %v1632
  %1782 = vmatpush.bf16.msra.mxu0 %v1630
  %1783 = vmatpush.bf16.msra.mxu0 %v1628
  %1784 = vmatpush.bf16.msra.mxu0 %v1626
  %1785 = vmatpush.bf16.msra.mxu0 %v1624
  %1786 = vmatpush.bf16.msra.mxu0 %v1622
  %1787 = vmatpush.bf16.msra.mxu0 %v1620
  %1788 = vmatpush.bf16.msra.mxu0 %v1618
  %1789 = vmatmul.bf16.gmra.mxu0 %v1252
  %v1790 = vpop.f32.mrf.mxu0
  %v1791 = vadd.f32 %v1778, %v1790
  %v1792 = vpop.f32.mrf.mxu0
  %1793 = vdwg.mxu0
  %1794 = vmatpush.bf16.msra.mxu0 %v1737
  %1795 = vmatpush.bf16.msra.mxu0 %v1646
  %1796 = vmatpush.bf16.msra.mxu0 %v1644
  %1797 = vmatpush.bf16.msra.mxu0 %v1642
  %1798 = vmatpush.bf16.msra.mxu0 %v1640
  %1799 = vmatpush.bf16.msra.mxu0 %v1638
  %1800 = vmatpush.bf16.msra.mxu0 %v1636
  %1801 = vmatpush.bf16.msra.mxu0 %v1634
  %1802 = vmatmul.bf16.gmra.mxu0 %v1730
  %v1803 = vpop.f32.mrf.mxu0
  %v1804 = vadd.f32 %v1791, %v1803
  %v1805 = vpop.f32.mrf.mxu0
  %1806 = vdwg.mxu0
  %1807 = vmatpush.bf16.msra.mxu0 %v1585
  %1808 = vmatpush.bf16.msra.mxu0 %v1583
  %1809 = vmatpush.bf16.msra.mxu0 %v1581
  %1810 = vmatpush.bf16.msra.mxu0 %v1579
  %1811 = vmatpush.bf16.msra.mxu0 %v1577
  %1812 = vmatpush.bf16.msra.mxu0 %v1575
  %1813 = vmatpush.bf16.msra.mxu0 %v1573
  %1814 = vmatpush.bf16.msra.mxu0 %v1571
  %1815 = vmatmul.bf16.gmra.mxu0 %v1249
  %v1816 = vpop.f32.mrf.mxu0
  %v1817 = vadd.f32 0.0, %v1816
  %v1818 = vpop.f32.mrf.mxu0
  %1819 = vdwg.mxu0
  %1820 = vmatpush.bf16.msra.mxu0 %v1601
  %1821 = vmatpush.bf16.msra.mxu0 %v1599
  %1822 = vmatpush.bf16.msra.mxu0 %v1597
  %1823 = vmatpush.bf16.msra.mxu0 %v1595
  %1824 = vmatpush.bf16.msra.mxu0 %v1593
  %1825 = vmatpush.bf16.msra.mxu0 %v1591
  %1826 = vmatpush.bf16.msra.mxu0 %v1589
  %1827 = vmatpush.bf16.msra.mxu0 %v1587
  %1828 = vmatmul.bf16.gmra.mxu0 %v1250
  %v1829 = vpop.f32.mrf.mxu0
  %v1830 = vadd.f32 %v1817, %v1829
  %v1831 = vpop.f32.mrf.mxu0
  %1832 = vdwg.mxu0
  %1833 = vmatpush.bf16.msra.mxu0 %v1617
  %1834 = vmatpush.bf16.msra.mxu0 %v1615
  %1835 = vmatpush.bf16.msra.mxu0 %v1613
  %1836 = vmatpush.bf16.msra.mxu0 %v1611
  %1837 = vmatpush.bf16.msra.mxu0 %v1609
  %1838 = vmatpush.bf16.msra.mxu0 %v1607
  %1839 = vmatpush.bf16.msra.mxu0 %v1605
  %1840 = vmatpush.bf16.msra.mxu0 %v1603
  %1841 = vmatmul.bf16.gmra.mxu0 %v1251
  %v1842 = vpop.f32.mrf.mxu0
  %v1843 = vadd.f32 %v1830, %v1842
  %v1844 = vpop.f32.mrf.mxu0
  %1845 = vdwg.mxu0
  %1846 = vmatpush.bf16.msra.mxu0 %v1633
  %1847 = vmatpush.bf16.msra.mxu0 %v1631
  %1848 = vmatpush.bf16.msra.mxu0 %v1629
  %1849 = vmatpush.bf16.msra.mxu0 %v1627
  %1850 = vmatpush.bf16.msra.mxu0 %v1625
  %1851 = vmatpush.bf16.msra.mxu0 %v1623
  %1852 = vmatpush.bf16.msra.mxu0 %v1621
  %1853 = vmatpush.bf16.msra.mxu0 %v1619
  %1854 = vmatmul.bf16.gmra.mxu0 %v1252
  %v1855 = vpop.f32.mrf.mxu0
  %v1856 = vadd.f32 %v1843, %v1855
  %v1857 = vpop.f32.mrf.mxu0
  %1858 = vdwg.mxu0
  %1859 = vmatpush.bf16.msra.mxu0 %v1740
  %1860 = vmatpush.bf16.msra.mxu0 %v1647
  %1861 = vmatpush.bf16.msra.mxu0 %v1645
  %1862 = vmatpush.bf16.msra.mxu0 %v1643
  %1863 = vmatpush.bf16.msra.mxu0 %v1641
  %1864 = vmatpush.bf16.msra.mxu0 %v1639
  %1865 = vmatpush.bf16.msra.mxu0 %v1637
  %1866 = vmatpush.bf16.msra.mxu0 %v1635
  %1867 = vmatmul.bf16.gmra.mxu0 %v1730
  %v1868 = vpop.f32.mrf.mxu0
  %v1869 = vadd.f32 %v1856, %v1868
  %v1870 = vpop.f32.mrf.mxu0
  %1871 = vdwg.mxu0
  %v1872 = vpack.c.bf16 %v1869, %v1804
  %vm1873 = vcmask 769028
  %vm1874 = vmor %vm1873, %vm76
  %1875 = vst.msk [vmem:[#allocation3] sm:$0xff] %vm1874, %v1872
  %v1876 = vld [vmem:[#allocation3] sm:$0xff]
  %v1877 = vld [vmem:[%s4] sm:$0xf]
  %v1878 = vld [vmem:[%s4 + $0x4] sm:$0xf]
  %s1879 = scalar_lea.vmem %s4, 8
  %v1880 = vld [vmem:[%s1879] sm:$0xf]
  %v1881 = vld [vmem:[%s1879 + $0x4] sm:$0xf]
  %v1884 = vunpack.c.l.b16 %v1880
  %v1885 = vunpack.c.l.b16 %v1881
  %v1886 = vpack.c.b16 %v1885, %v1884
  %v1888 = vunpack.c.l.b16 %v1876
  %v1889 = vunpack.c.h.b16 %v1876
  %v1890 = vpack.c.b16 %v1888, %v1888
  %v1891 = vpack.c.b16 %v1889, %v1889
  %1892 = vrot.lane.b32.xlu0 %v1890, 127
  %v1893 = vpop.permute.xlu0 %1892
  %1894 = vrot.lane.b32.xlu0 %v1891, 127
  %v1895 = vpop.permute.xlu0 %1894
  %v1896 = vsel %vm66, %v1893, %v1895
  %v1898 = vsel %vm72, %v1886, 0
  %v1901 = vsel %vm76, %v1896, 0
  %v1904 = vsel %vm76, %v1895, 0
  %1906 = vmatpush.bf16.msra.mxu0 0
  %1907 = vmatpush.bf16.msra.mxu0 0
  %1908 = vmatpush.bf16.msra.mxu0 0
  %1909 = vmatpush.bf16.msra.mxu0 0
  %1910 = vmatpush.bf16.msra.mxu0 0
  %1911 = vmatpush.bf16.msra.mxu0 0
  %1912 = vmatpush.bf16.msra.mxu0 0
  %1913 = vmatpush.bf16.msra.mxu0 %v1901
  %1914 = vmatmul.bf16.gmra.mxu0 %v1898
  %v1915 = vpop.f32.mrf.mxu0
  %v1916 = vadd.f32 0.0, %v1915
  %v1917 = vpop.f32.mrf.mxu0
  %v1918 = vadd.f32 0.0, %v1917
  %1919 = vdwg.mxu0
  %1920 = vmatpush.bf16.msra.mxu0 0
  %1921 = vmatpush.bf16.msra.mxu0 0
  %1922 = vmatpush.bf16.msra.mxu0 0
  %1923 = vmatpush.bf16.msra.mxu0 0
  %1924 = vmatpush.bf16.msra.mxu0 0
  %1925 = vmatpush.bf16.msra.mxu0 0
  %1926 = vmatpush.bf16.msra.mxu0 0
  %1927 = vmatpush.bf16.msra.mxu0 %v1904
  %1928 = vmatmul.bf16.gmra.mxu0 %v1898
  %v1929 = vpop.f32.mrf.mxu0
  %v1930 = vadd.f32 0.0, %v1929
  %v1931 = vpop.f32.mrf.mxu0
  %v1932 = vadd.f32 0.0, %v1931
  %1933 = vdwg.mxu0
  %v1936 = vunpack.c.l.b16 %v1877
  %v1937 = vunpack.c.l.b16 %v1878
  %v1938 = vpack.c.b16 %v1937, %v1936
  %v1940 = vsel %vm72, %v1938, 0
  %v1943 = vsel %vm76, %v1890, 0
  %v1946 = vsel %vm76, %v1891, 0
  %1948 = vmatpush.bf16.msra.mxu0 0
  %1949 = vmatpush.bf16.msra.mxu0 0
  %1950 = vmatpush.bf16.msra.mxu0 0
  %1951 = vmatpush.bf16.msra.mxu0 0
  %1952 = vmatpush.bf16.msra.mxu0 0
  %1953 = vmatpush.bf16.msra.mxu0 0
  %1954 = vmatpush.bf16.msra.mxu0 0
  %1955 = vmatpush.bf16.msra.mxu0 %v1943
  %1956 = vmatmul.bf16.gmra.mxu0 %v1940
  %v1957 = vpop.f32.mrf.mxu0
  %v1958 = vadd.f32 %v1916, %v1957
  %v1959 = vpop.f32.mrf.mxu0
  %v1960 = vadd.f32 %v1918, %v1959
  %1961 = vdwg.mxu0
  %1962 = vmatpush.bf16.msra.mxu0 0
  %1963 = vmatpush.bf16.msra.mxu0 0
  %1964 = vmatpush.bf16.msra.mxu0 0
  %1965 = vmatpush.bf16.msra.mxu0 0
  %1966 = vmatpush.bf16.msra.mxu0 0
  %1967 = vmatpush.bf16.msra.mxu0 0
  %1968 = vmatpush.bf16.msra.mxu0 0
  %1969 = vmatpush.bf16.msra.mxu0 %v1946
  %1970 = vmatmul.bf16.gmra.mxu0 %v1940
  %v1971 = vpop.f32.mrf.mxu0
  %v1972 = vadd.f32 %v1930, %v1971
  %v1973 = vpop.f32.mrf.mxu0
  %v1974 = vadd.f32 %v1932, %v1973
  %1975 = vdwg.mxu0
  %s1976 = scalar_lea.vmem %s4, 16
  %v1977 = vld [vmem:[%s1976] sm:$0xf]
  %v1978 = vld [vmem:[%s1976 + $0x4] sm:$0xf]
  %v1981 = vunpack.c.l.b16 %v1977
  %v1982 = vunpack.c.l.b16 %v1978
  %v1983 = vpack.c.b16 %v1982, %v1981
  %1984 = vrot.lane.b32.xlu0 %v1890, 126
  %v1985 = vpop.permute.xlu0 %1984
  %1986 = vrot.lane.b32.xlu0 %v1891, 126
  %v1987 = vpop.permute.xlu0 %1986
  %v1988 = vsel %vm286, %v1985, %v1987
  %v1990 = vsel %vm72, %v1983, 0
  %v1993 = vsel %vm76, %v1988, 0
  %v1996 = vsel %vm76, %v1987, 0
  %1998 = vmatpush.bf16.msra.mxu0 0
  %1999 = vmatpush.bf16.msra.mxu0 0
  %2000 = vmatpush.bf16.msra.mxu0 0
  %2001 = vmatpush.bf16.msra.mxu0 0
  %2002 = vmatpush.bf16.msra.mxu0 0
  %2003 = vmatpush.bf16.msra.mxu0 0
  %2004 = vmatpush.bf16.msra.mxu0 0
  %2005 = vmatpush.bf16.msra.mxu0 %v1993
  %2006 = vmatmul.bf16.gmra.mxu0 %v1990
  %v2007 = vpop.f32.mrf.mxu0
  %v2008 = vadd.f32 0.0, %v2007
  %v2009 = vpop.f32.mrf.mxu0
  %v2010 = vadd.f32 0.0, %v2009
  %2011 = vdwg.mxu0
  %2012 = vmatpush.bf16.msra.mxu0 0
  %2013 = vmatpush.bf16.msra.mxu0 0
  %2014 = vmatpush.bf16.msra.mxu0 0
  %2015 = vmatpush.bf16.msra.mxu0 0
  %2016 = vmatpush.bf16.msra.mxu0 0
  %2017 = vmatpush.bf16.msra.mxu0 0
  %2018 = vmatpush.bf16.msra.mxu0 0
  %2019 = vmatpush.bf16.msra.mxu0 %v1996
  %2020 = vmatmul.bf16.gmra.mxu0 %v1990
  %v2021 = vpop.f32.mrf.mxu0
  %v2022 = vadd.f32 0.0, %v2021
  %v2023 = vpop.f32.mrf.mxu0
  %v2024 = vadd.f32 0.0, %v2023
  %2025 = vdwg.mxu0
  %v2026 = vadd.f32 %v1958, %v2008
  %v2027 = vadd.f32 %v1972, %v2022
  %v2028 = vadd.f32 %v1960, %v2010
  %v2029 = vadd.f32 %v1974, %v2024
  %s2030 = scalar_lea.vmem %s4, 24
  %v2031 = vld [vmem:[%s2030] sm:$0xf]
  %v2032 = vld [vmem:[%s2030 + $0x4] sm:$0xf]
  %v2035 = vunpack.c.l.b16 %v2031
  %v2036 = vunpack.c.l.b16 %v2032
  %v2037 = vpack.c.b16 %v2036, %v2035
  %2038 = vrot.lane.b32.xlu0 %v1890, 118
  %v2039 = vpop.permute.xlu0 %2038
  %2040 = vrot.lane.b32.xlu0 %v1891, 118
  %v2041 = vpop.permute.xlu0 %2040
  %vm2042 = vcmask 965632
  %v2043 = vsel %vm2042, %v2039, %v2041
  %v2045 = vsel %vm72, %v2037, 0
  %v2048 = vsel %vm76, %v2043, 0
  %v2051 = vsel %vm76, %v2041, 0
  %2053 = vmatpush.bf16.msra.mxu0 0
  %2054 = vmatpush.bf16.msra.mxu0 0
  %2055 = vmatpush.bf16.msra.mxu0 0
  %2056 = vmatpush.bf16.msra.mxu0 0
  %2057 = vmatpush.bf16.msra.mxu0 0
  %2058 = vmatpush.bf16.msra.mxu0 0
  %2059 = vmatpush.bf16.msra.mxu0 0
  %2060 = vmatpush.bf16.msra.mxu0 %v2048
  %2061 = vmatmul.bf16.gmra.mxu0 %v2045
  %v2062 = vpop.f32.mrf.mxu0
  %v2063 = vadd.f32 0.0, %v2062
  %v2064 = vpop.f32.mrf.mxu0
  %v2065 = vadd.f32 0.0, %v2064
  %2066 = vdwg.mxu0
  %2067 = vmatpush.bf16.msra.mxu0 0
  %2068 = vmatpush.bf16.msra.mxu0 0
  %2069 = vmatpush.bf16.msra.mxu0 0
  %2070 = vmatpush.bf16.msra.mxu0 0
  %2071 = vmatpush.bf16.msra.mxu0 0
  %2072 = vmatpush.bf16.msra.mxu0 0
  %2073 = vmatpush.bf16.msra.mxu0 0
  %2074 = vmatpush.bf16.msra.mxu0 %v2051
  %2075 = vmatmul.bf16.gmra.mxu0 %v2045
  %v2076 = vpop.f32.mrf.mxu0
  %v2077 = vadd.f32 0.0, %v2076
  %v2078 = vpop.f32.mrf.mxu0
  %v2079 = vadd.f32 0.0, %v2078
  %2080 = vdwg.mxu0
  %v2081 = vadd.f32 %v2026, %v2063
  %v2082 = vadd.f32 %v2027, %v2077
  %v2083 = vadd.f32 %v2028, %v2065
  %v2084 = vadd.f32 %v2029, %v2079
  %s2085 = scalar_lea.vmem %s4, 32
  %v2086 = vld [vmem:[%s2085] sm:$0xf]
  %v2087 = vld [vmem:[%s2085 + $0x4] sm:$0xf]
  %v2090 = vunpack.c.l.b16 %v2086
  %v2091 = vunpack.c.l.b16 %v2087
  %v2092 = vpack.c.b16 %v2091, %v2090
  %2093 = vrot.lane.b32.xlu0 %v1890, 117
  %v2094 = vpop.permute.xlu0 %2093
  %2095 = vrot.lane.b32.xlu0 %v1891, 117
  %v2096 = vpop.permute.xlu0 %2095
  %vm2097 = vcmask 957440
  %v2098 = vsel %vm2097, %v2094, %v2096
  %v2100 = vsel %vm72, %v2092, 0
  %v2103 = vsel %vm76, %v2098, 0
  %v2106 = vsel %vm76, %v2096, 0
  %2108 = vmatpush.bf16.msra.mxu0 0
  %2109 = vmatpush.bf16.msra.mxu0 0
  %2110 = vmatpush.bf16.msra.mxu0 0
  %2111 = vmatpush.bf16.msra.mxu0 0
  %2112 = vmatpush.bf16.msra.mxu0 0
  %2113 = vmatpush.bf16.msra.mxu0 0
  %2114 = vmatpush.bf16.msra.mxu0 0
  %2115 = vmatpush.bf16.msra.mxu0 %v2103
  %2116 = vmatmul.bf16.gmra.mxu0 %v2100
  %v2117 = vpop.f32.mrf.mxu0
  %v2118 = vadd.f32 0.0, %v2117
  %v2119 = vpop.f32.mrf.mxu0
  %v2120 = vadd.f32 0.0, %v2119
  %2121 = vdwg.mxu0
  %2122 = vmatpush.bf16.msra.mxu0 0
  %2123 = vmatpush.bf16.msra.mxu0 0
  %2124 = vmatpush.bf16.msra.mxu0 0
  %2125 = vmatpush.bf16.msra.mxu0 0
  %2126 = vmatpush.bf16.msra.mxu0 0
  %2127 = vmatpush.bf16.msra.mxu0 0
  %2128 = vmatpush.bf16.msra.mxu0 0
  %2129 = vmatpush.bf16.msra.mxu0 %v2106
  %2130 = vmatmul.bf16.gmra.mxu0 %v2100
  %v2131 = vpop.f32.mrf.mxu0
  %v2132 = vadd.f32 0.0, %v2131
  %v2133 = vpop.f32.mrf.mxu0
  %v2134 = vadd.f32 0.0, %v2133
  %2135 = vdwg.mxu0
  %v2136 = vadd.f32 %v2081, %v2118
  %v2137 = vadd.f32 %v2082, %v2132
  %v2138 = vadd.f32 %v2083, %v2120
  %v2139 = vadd.f32 %v2084, %v2134
  %s2140 = scalar_lea.vmem %s4, 40
  %v2141 = vld [vmem:[%s2140] sm:$0xf]
  %v2142 = vld [vmem:[%s2140 + $0x4] sm:$0xf]
  %v2145 = vunpack.c.l.b16 %v2141
  %v2146 = vunpack.c.l.b16 %v2142
  %v2147 = vpack.c.b16 %v2146, %v2145
  %2148 = vrot.lane.b32.xlu0 %v1890, 116
  %v2149 = vpop.permute.xlu0 %2148
  %2150 = vrot.lane.b32.xlu0 %v1891, 116
  %v2151 = vpop.permute.xlu0 %2150
  %vm2152 = vcmask 949248
  %v2153 = vsel %vm2152, %v2149, %v2151
  %v2155 = vsel %vm72, %v2147, 0
  %v2158 = vsel %vm76, %v2153, 0
  %v2161 = vsel %vm76, %v2151, 0
  %2163 = vmatpush.bf16.msra.mxu0 0
  %2164 = vmatpush.bf16.msra.mxu0 0
  %2165 = vmatpush.bf16.msra.mxu0 0
  %2166 = vmatpush.bf16.msra.mxu0 0
  %2167 = vmatpush.bf16.msra.mxu0 0
  %2168 = vmatpush.bf16.msra.mxu0 0
  %2169 = vmatpush.bf16.msra.mxu0 0
  %2170 = vmatpush.bf16.msra.mxu0 %v2158
  %2171 = vmatmul.bf16.gmra.mxu0 %v2155
  %v2172 = vpop.f32.mrf.mxu0
  %v2173 = vadd.f32 0.0, %v2172
  %v2174 = vpop.f32.mrf.mxu0
  %v2175 = vadd.f32 0.0, %v2174
  %2176 = vdwg.mxu0
  %2177 = vmatpush.bf16.msra.mxu0 0
  %2178 = vmatpush.bf16.msra.mxu0 0
  %2179 = vmatpush.bf16.msra.mxu0 0
  %2180 = vmatpush.bf16.msra.mxu0 0
  %2181 = vmatpush.bf16.msra.mxu0 0
  %2182 = vmatpush.bf16.msra.mxu0 0
  %2183 = vmatpush.bf16.msra.mxu0 0
  %2184 = vmatpush.bf16.msra.mxu0 %v2161
  %2185 = vmatmul.bf16.gmra.mxu0 %v2155
  %v2186 = vpop.f32.mrf.mxu0
  %v2187 = vadd.f32 0.0, %v2186
  %v2188 = vpop.f32.mrf.mxu0
  %v2189 = vadd.f32 0.0, %v2188
  %2190 = vdwg.mxu0
  %v2191 = vadd.f32 %v2136, %v2173
  %v2192 = vadd.f32 %v2137, %v2187
  %v2193 = vadd.f32 %v2138, %v2175
  %v2194 = vadd.f32 %v2139, %v2189
  %s2195 = scalar_lea.vmem %s4, 48
  %v2196 = vld [vmem:[%s2195] sm:$0xf]
  %v2197 = vld [vmem:[%s2195 + $0x4] sm:$0xf]
  %v2200 = vunpack.c.l.b16 %v2196
  %v2201 = vunpack.c.l.b16 %v2197
  %v2202 = vpack.c.b16 %v2201, %v2200
  %2203 = vrot.lane.b32.xlu0 %v1890, 108
  %v2204 = vpop.permute.xlu0 %2203
  %2205 = vrot.lane.b32.xlu0 %v1891, 108
  %v2206 = vpop.permute.xlu0 %2205
  %v2207 = vsel %vm661, %v2204, %v2206
  %v2209 = vsel %vm72, %v2202, 0
  %v2212 = vsel %vm76, %v2207, 0
  %v2215 = vsel %vm76, %v2206, 0
  %2217 = vmatpush.bf16.msra.mxu0 0
  %2218 = vmatpush.bf16.msra.mxu0 0
  %2219 = vmatpush.bf16.msra.mxu0 0
  %2220 = vmatpush.bf16.msra.mxu0 0
  %2221 = vmatpush.bf16.msra.mxu0 0
  %2222 = vmatpush.bf16.msra.mxu0 0
  %2223 = vmatpush.bf16.msra.mxu0 0
  %2224 = vmatpush.bf16.msra.mxu0 %v2212
  %2225 = vmatmul.bf16.gmra.mxu0 %v2209
  %v2226 = vpop.f32.mrf.mxu0
  %v2227 = vadd.f32 0.0, %v2226
  %v2228 = vpop.f32.mrf.mxu0
  %v2229 = vadd.f32 0.0, %v2228
  %2230 = vdwg.mxu0
  %2231 = vmatpush.bf16.msra.mxu0 0
  %2232 = vmatpush.bf16.msra.mxu0 0
  %2233 = vmatpush.bf16.msra.mxu0 0
  %2234 = vmatpush.bf16.msra.mxu0 0
  %2235 = vmatpush.bf16.msra.mxu0 0
  %2236 = vmatpush.bf16.msra.mxu0 0
  %2237 = vmatpush.bf16.msra.mxu0 0
  %2238 = vmatpush.bf16.msra.mxu0 %v2215
  %2239 = vmatmul.bf16.gmra.mxu0 %v2209
  %v2240 = vpop.f32.mrf.mxu0
  %v2241 = vadd.f32 0.0, %v2240
  %v2242 = vpop.f32.mrf.mxu0
  %v2243 = vadd.f32 0.0, %v2242
  %2244 = vdwg.mxu0
  %v2245 = vadd.f32 %v2191, %v2227
  %v2246 = vadd.f32 %v2192, %v2241
  %v2247 = vadd.f32 %v2193, %v2229
  %v2248 = vadd.f32 %v2194, %v2243
  %s2249 = scalar_lea.vmem %s4, 56
  %v2250 = vld [vmem:[%s2249] sm:$0xf]
  %v2251 = vld [vmem:[%s2249 + $0x4] sm:$0xf]
  %v2254 = vunpack.c.l.b16 %v2250
  %v2255 = vunpack.c.l.b16 %v2251
  %v2256 = vpack.c.b16 %v2255, %v2254
  %2257 = vrot.lane.b32.xlu0 %v1890, 107
  %v2258 = vpop.permute.xlu0 %2257
  %2259 = vrot.lane.b32.xlu0 %v1891, 107
  %v2260 = vpop.permute.xlu0 %2259
  %vm2261 = vcmask 875520
  %v2262 = vsel %vm2261, %v2258, %v2260
  %v2264 = vsel %vm72, %v2256, 0
  %v2267 = vsel %vm76, %v2262, 0
  %v2270 = vsel %vm76, %v2260, 0
  %2272 = vmatpush.bf16.msra.mxu0 0
  %2273 = vmatpush.bf16.msra.mxu0 0
  %2274 = vmatpush.bf16.msra.mxu0 0
  %2275 = vmatpush.bf16.msra.mxu0 0
  %2276 = vmatpush.bf16.msra.mxu0 0
  %2277 = vmatpush.bf16.msra.mxu0 0
  %2278 = vmatpush.bf16.msra.mxu0 0
  %2279 = vmatpush.bf16.msra.mxu0 %v2267
  %2280 = vmatmul.bf16.gmra.mxu0 %v2264
  %v2281 = vpop.f32.mrf.mxu0
  %v2282 = vadd.f32 0.0, %v2281
  %v2283 = vpop.f32.mrf.mxu0
  %v2284 = vadd.f32 0.0, %v2283
  %2285 = vdwg.mxu0
  %2286 = vmatpush.bf16.msra.mxu0 0
  %2287 = vmatpush.bf16.msra.mxu0 0
  %2288 = vmatpush.bf16.msra.mxu0 0
  %2289 = vmatpush.bf16.msra.mxu0 0
  %2290 = vmatpush.bf16.msra.mxu0 0
  %2291 = vmatpush.bf16.msra.mxu0 0
  %2292 = vmatpush.bf16.msra.mxu0 0
  %2293 = vmatpush.bf16.msra.mxu0 %v2270
  %2294 = vmatmul.bf16.gmra.mxu0 %v2264
  %v2295 = vpop.f32.mrf.mxu0
  %v2296 = vadd.f32 0.0, %v2295
  %v2297 = vpop.f32.mrf.mxu0
  %v2298 = vadd.f32 0.0, %v2297
  %2299 = vdwg.mxu0
  %v2300 = vadd.f32 %v2245, %v2282
  %v2301 = vadd.f32 %v2246, %v2296
  %v2302 = vadd.f32 %v2247, %v2284
  %v2303 = vadd.f32 %v2248, %v2298
  %s2304 = scalar_lea.vmem %s4, 64
  %v2305 = vld [vmem:[%s2304] sm:$0xf]
  %v2306 = vld [vmem:[%s2304 + $0x4] sm:$0xf]
  %v2309 = vunpack.c.l.b16 %v2305
  %v2310 = vunpack.c.l.b16 %v2306
  %v2311 = vpack.c.b16 %v2310, %v2309
  %2312 = vrot.lane.b32.xlu0 %v1890, 106
  %v2313 = vpop.permute.xlu0 %2312
  %2314 = vrot.lane.b32.xlu0 %v1891, 106
  %v2315 = vpop.permute.xlu0 %2314
  %vm2316 = vcmask 867328
  %v2317 = vsel %vm2316, %v2313, %v2315
  %v2319 = vsel %vm72, %v2311, 0
  %v2322 = vsel %vm76, %v2317, 0
  %v2325 = vsel %vm76, %v2315, 0
  %2327 = vmatpush.bf16.msra.mxu0 0
  %2328 = vmatpush.bf16.msra.mxu0 0
  %2329 = vmatpush.bf16.msra.mxu0 0
  %2330 = vmatpush.bf16.msra.mxu0 0
  %2331 = vmatpush.bf16.msra.mxu0 0
  %2332 = vmatpush.bf16.msra.mxu0 0
  %2333 = vmatpush.bf16.msra.mxu0 0
  %2334 = vmatpush.bf16.msra.mxu0 %v2322
  %2335 = vmatmul.bf16.gmra.mxu0 %v2319
  %v2336 = vpop.f32.mrf.mxu0
  %v2337 = vadd.f32 0.0, %v2336
  %v2338 = vpop.f32.mrf.mxu0
  %v2339 = vadd.f32 0.0, %v2338
  %2340 = vdwg.mxu0
  %2341 = vmatpush.bf16.msra.mxu0 0
  %2342 = vmatpush.bf16.msra.mxu0 0
  %2343 = vmatpush.bf16.msra.mxu0 0
  %2344 = vmatpush.bf16.msra.mxu0 0
  %2345 = vmatpush.bf16.msra.mxu0 0
  %2346 = vmatpush.bf16.msra.mxu0 0
  %2347 = vmatpush.bf16.msra.mxu0 0
  %2348 = vmatpush.bf16.msra.mxu0 %v2325
  %2349 = vmatmul.bf16.gmra.mxu0 %v2319
  %v2350 = vpop.f32.mrf.mxu0
  %v2351 = vadd.f32 0.0, %v2350
  %v2352 = vpop.f32.mrf.mxu0
  %v2353 = vadd.f32 0.0, %v2352
  %2354 = vdwg.mxu0
  %v2355 = vadd.f32 %v2300, %v2337
  %v2356 = vadd.f32 %v2301, %v2351
  %v2357 = vadd.f32 %v2302, %v2339
  %v2358 = vadd.f32 %v2303, %v2353
  %v2359 = vld [vmem:[%s5] sm:$0xff]
  %v2360 = vld [vmem:[%s5 + $0x8] sm:$0xff]
  %2362 = vset.pattern.permute.xlu0 0
  %2363 = vperm.xlu0 %2362, %v2359
  %v2364 = vpop.permute.xlu0 %2363
  %2367 = vset.pattern.permute.xlu0 0
  %2368 = vperm.xlu0 %2367, %v2360
  %v2369 = vpop.permute.xlu0 %2368
  %v2371 = vadd.f32 %v2355, %v2364
  %v2372 = vadd.f32 %v2356, %v2364
  %v2373 = vadd.f32 %v2357, %v2369
  %v2374 = vadd.f32 %v2358, %v2369
  %v2375 = vmax.f32 %v2371, 0.0
  %v2376 = vmax.f32 %v2372, 0.0
  %v2377 = vmax.f32 %v2373, 0.0
  %v2378 = vmax.f32 %v2374, 0.0
  %2379 = vst [vmem:[#allocation4] sm:$0xff] %v2375
  %vm2380 = vcmask 588800
  %2381 = vst.msk [vmem:[#allocation4 + $0x8] sm:$0xff] %vm2380, %v2376
  %2382 = vst [vmem:[#allocation4 + $0x10] sm:$0xff] %v2377
  %2383 = vst.msk [vmem:[#allocation4 + $0x18] sm:$0xff] %vm2380, %v2378
  %v2384 = vld [vmem:[#allocation4] sm:$0xff]
  %v2385 = vld [vmem:[#allocation4 + $0x8] sm:$0xff]
  %v2386 = vld [vmem:[#allocation4 + $0x10] sm:$0xff]
  %v2387 = vld [vmem:[#allocation4 + $0x18] sm:$0xff]
  %2392 = vrot.lane.b32.xlu0 %v2384, 127
  %v2393 = vpop.permute.xlu0 %2392
  %2394 = vrot.lane.b32.xlu0 %v2385, 127
  %v2395 = vpop.permute.xlu0 %2394
  %2396 = vrot.lane.b32.xlu0 %v2386, 127
  %v2397 = vpop.permute.xlu0 %2396
  %2398 = vrot.lane.b32.xlu0 %v2387, 127
  %v2399 = vpop.permute.xlu0 %2398
  %v2400 = vsel %vm1191, %v2393, %v2395
  %v2401 = vsel %vm1191, %v2397, %v2399
  %v2406 = vmax.f32 %v2384, %v2400
  %v2407 = vmax.f32 %v2385, %v2395
  %v2408 = vmax.f32 %v2386, %v2401
  %v2409 = vmax.f32 %v2387, %v2399
  %2414 = vrot.lane.b32.xlu0 %v2406, 118
  %v2415 = vpop.permute.xlu0 %2414
  %2416 = vrot.lane.b32.xlu0 %v2407, 118
  %v2417 = vpop.permute.xlu0 %2416
  %2418 = vrot.lane.b32.xlu0 %v2408, 118
  %v2419 = vpop.permute.xlu0 %2418
  %2420 = vrot.lane.b32.xlu0 %v2409, 118
  %v2421 = vpop.permute.xlu0 %2420
  %vm2422 = vcmask 965632
  %v2423 = vsel %vm2422, %v2415, %v2417
  %v2424 = vsel %vm2422, %v2419, %v2421
  %v2429 = vmax.f32 %v2406, %v2423
  %v2430 = vmax.f32 %v2407, %v2417
  %v2431 = vmax.f32 %v2408, %v2424
  %v2432 = vmax.f32 %v2409, %v2421
  %v2433 = vpack.c.bf16 %v2431, %v2429
  %v2434 = vpack.c.bf16 %v2432, %v2430
  %v2435 = vld [vmem:[%s8] sm:$0xff]
  %v2436 = vld [vmem:[%s8 + $0x8] sm:$0xff]
  %v2437 = vld [vmem:[%s8 + $0x10] sm:$0xff]
  %v2438 = vld [vmem:[%s8 + $0x18] sm:$0xff]
  %v2439 = vld [vmem:[%s6] sm:$0xf]
  %v2440 = vld [vmem:[%s6 + $0x4] sm:$0xf]
  %v2441 = vld [vmem:[%s6 + $0x8] sm:$0xf]
  %v2442 = vld [vmem:[%s6 + $0xc] sm:$0xf]
  %v2443 = vld [vmem:[%s6 + $0x10] sm:$0xf]
  %v2444 = vld [vmem:[%s6 + $0x14] sm:$0xf]
  %v2445 = vld [vmem:[%s6 + $0x18] sm:$0xf]
  %v2446 = vld [vmem:[%s6 + $0x1c] sm:$0xf]
  %v2447 = vld [vmem:[%s6 + $0x20] sm:$0xf]
  %v2448 = vld [vmem:[%s6 + $0x24] sm:$0xf]
  %v2449 = vld [vmem:[%s6 + $0x28] sm:$0xf]
  %v2450 = vld [vmem:[%s6 + $0x2c] sm:$0xf]
  %v2451 = vld [vmem:[%s6 + $0x30] sm:$0xf]
  %v2452 = vld [vmem:[%s6 + $0x34] sm:$0xf]
  %v2453 = vld [vmem:[%s6 + $0x38] sm:$0xf]
  %v2454 = vld [vmem:[%s6 + $0x3c] sm:$0xf]
  %v2455 = vld [vmem:[%s6 + $0x40] sm:$0xf]
  %v2456 = vld [vmem:[%s6 + $0x44] sm:$0xf]
  %v2457 = vld [vmem:[%s6 + $0x48] sm:$0xf]
  %v2458 = vld [vmem:[%s6 + $0x4c] sm:$0xf]
  %v2459 = vld [vmem:[%s6 + $0x50] sm:$0xf]
  %v2460 = vld [vmem:[%s6 + $0x54] sm:$0xf]
  %v2461 = vld [vmem:[%s6 + $0x58] sm:$0xf]
  %v2462 = vld [vmem:[%s6 + $0x5c] sm:$0x7]
  %v2487 = vunpack.c.l.b16 %v2439
  %v2488 = vunpack.c.l.b16 %v2440
  %v2489 = vunpack.c.l.b16 %v2441
  %v2490 = vunpack.c.l.b16 %v2442
  %v2491 = vunpack.c.l.b16 %v2443
  %v2492 = vunpack.c.l.b16 %v2444
  %v2493 = vunpack.c.l.b16 %v2445
  %v2494 = vunpack.c.l.b16 %v2446
  %v2495 = vunpack.c.l.b16 %v2447
  %v2496 = vunpack.c.l.b16 %v2448
  %v2497 = vunpack.c.l.b16 %v2449
  %v2498 = vunpack.c.l.b16 %v2450
  %v2499 = vunpack.c.l.b16 %v2451
  %v2500 = vunpack.c.l.b16 %v2452
  %v2501 = vunpack.c.l.b16 %v2453
  %v2502 = vunpack.c.l.b16 %v2454
  %v2503 = vunpack.c.l.b16 %v2455
  %v2504 = vunpack.c.l.b16 %v2456
  %v2505 = vunpack.c.l.b16 %v2457
  %v2506 = vunpack.c.l.b16 %v2458
  %v2507 = vunpack.c.l.b16 %v2459
  %v2508 = vunpack.c.l.b16 %v2460
  %v2509 = vunpack.c.l.b16 %v2461
  %v2510 = vunpack.c.l.b16 %v2462
  %v2511 = vpack.c.b16 %v2488, %v2487
  %v2512 = vpack.c.b16 %v2490, %v2489
  %v2513 = vpack.c.b16 %v2492, %v2491
  %v2514 = vpack.c.b16 %v2494, %v2493
  %v2515 = vpack.c.b16 %v2496, %v2495
  %v2516 = vpack.c.b16 %v2498, %v2497
  %v2517 = vpack.c.b16 %v2500, %v2499
  %v2518 = vpack.c.b16 %v2502, %v2501
  %v2519 = vpack.c.b16 %v2504, %v2503
  %v2520 = vpack.c.b16 %v2506, %v2505
  %v2521 = vpack.c.b16 %v2508, %v2507
  %v2522 = vpack.c.b16 %v2510, %v2509
  %vm2534 = vcmask 498688
  %v2536 = vsel %vm2534, %v2434, 0
  %vm2538 = vcmask 1045504
  %vm2539 = vcmask 1046528
  %v2540 = vsel %vm2538, 4294967295, 65535
  %v2541 = vsel %vm2539, %v2540, 0
  %v2543 = vand.u32 %v2522, %v2541
  %2545 = vmatpush.bf16.msra.mxu0 %v2518
  %2546 = vmatpush.bf16.msra.mxu0 %v2517
  %2547 = vmatpush.bf16.msra.mxu0 %v2516
  %2548 = vmatpush.bf16.msra.mxu0 %v2515
  %2549 = vmatpush.bf16.msra.mxu0 %v2514
  %2550 = vmatpush.bf16.msra.mxu0 %v2513
  %2551 = vmatpush.bf16.msra.mxu0 %v2512
  %2552 = vmatpush.bf16.msra.mxu0 %v2511
  %2553 = vmatmul.bf16.gmra.mxu0 %v2433
  %v2554 = vpop.f32.mrf.mxu0
  %v2555 = vadd.f32 0.0, %v2554
  %v2556 = vpop.f32.mrf.mxu0
  %v2557 = vadd.f32 0.0, %v2556
  %2558 = vdwg.mxu0
  %2559 = vmatpush.bf16.msra.mxu0 0
  %2560 = vmatpush.bf16.msra.mxu0 0
  %2561 = vmatpush.bf16.msra.mxu0 0
  %2562 = vmatpush.bf16.msra.mxu0 0
  %2563 = vmatpush.bf16.msra.mxu0 %v2543
  %2564 = vmatpush.bf16.msra.mxu0 %v2521
  %2565 = vmatpush.bf16.msra.mxu0 %v2520
  %2566 = vmatpush.bf16.msra.mxu0 %v2519
  %2567 = vmatmul.bf16.gmra.mxu0 %v2536
  %v2568 = vpop.f32.mrf.mxu0
  %v2569 = vadd.f32 %v2555, %v2568
  %v2570 = vpop.f32.mrf.mxu0
  %v2571 = vadd.f32 %v2557, %v2570
  %2572 = vdwg.mxu0
  %v2573 = vld [vmem:[%s7] sm:$0xff]
  %v2574 = vld [vmem:[%s7 + $0x8] sm:$0xff]
  %v2575 = vld [vmem:[%s7 + $0x10] sm:$0xff]
  %v2576 = vld [vmem:[%s7 + $0x18] sm:$0xff]
  %vm2577 = vcmask 130048
  %v2579 = vsel %vm2577, %v2573, 0
  %v2582 = vsel %vm2577, %v2574, 0
  %v2585 = vsel %vm2577, %v2575, 0
  %v2588 = vsel %vm2577, %v2576, 0
  %2590 = vmatpush.msra.mxu0 0.0
  %2591 = vmatpush.msra.mxu0 0.0
  %2592 = vmatpush.msra.mxu0 0.0
  %2593 = vmatpush.msra.mxu0 0.0
  %2594 = vmatpush.msra.mxu0 0.0
  %2595 = vmatpush.msra.mxu0 0.0
  %2596 = vmatpush.msra.mxu0 0.0
  %2597 = vmatpush.msra.mxu0 0.0
  %2598 = vmatpush.msra.mxu0 0.0
  %2599 = vmatpush.msra.mxu0 0.0
  %2600 = vmatpush.msra.mxu0 0.0
  %2601 = vmatpush.msra.mxu0 0.0
  %2602 = vmatpush.msra.mxu0 0.0
  %2603 = vmatpush.msra.mxu0 0.0
  %2604 = vmatpush.msra.mxu0 %v2571
  %2605 = vmatpush.msra.mxu0 %v2569
  %2606 = vmatmul.f32.gmra.mxu0 %v2579
  %v2607 = vpop.f32.mrf.mxu0
  %v2608 = vadd.f32 0.0, %v2607
  %2609 = vmatmul.f32.gmra.mxu0 %v2582
  %v2610 = vpop.f32.mrf.mxu0
  %v2611 = vadd.f32 0.0, %v2610
  %2612 = vmatmul.f32.gmra.mxu0 %v2585
  %v2613 = vpop.f32.mrf.mxu0
  %v2614 = vadd.f32 0.0, %v2613
  %2615 = vmatmul.f32.gmra.mxu0 %v2588
  %v2616 = vpop.f32.mrf.mxu0
  %v2617 = vadd.f32 0.0, %v2616
  %2618 = vdwg.mxu0
  %2620 = vset.pattern.permute.xlu0 0
  %2621 = vperm.xlu0 %2620, %v2435
  %v2622 = vpop.permute.xlu0 %2621
  %2625 = vset.pattern.permute.xlu0 0
  %2626 = vperm.xlu0 %2625, %v2436
  %v2627 = vpop.permute.xlu0 %2626
  %2630 = vset.pattern.permute.xlu0 0
  %2631 = vperm.xlu0 %2630, %v2437
  %v2632 = vpop.permute.xlu0 %2631
  %2635 = vset.pattern.permute.xlu0 0
  %2636 = vperm.xlu0 %2635, %v2438
  %v2637 = vpop.permute.xlu0 %2636
  %v2639 = vadd.f32 %v2622, %v2608
  %v2640 = vadd.f32 %v2627, %v2611
  %v2641 = vadd.f32 %v2632, %v2614
  %v2642 = vadd.f32 %v2637, %v2617
  %2643 = vrot.lane.b32.xlu0 %v2511, 126
  %v2644 = vpop.permute.xlu0 %2643
  %2645 = vrot.lane.b32.xlu0 %v2512, 126
  %v2646 = vpop.permute.xlu0 %2645
  %2647 = vrot.lane.b32.xlu0 %v2513, 126
  %v2648 = vpop.permute.xlu0 %2647
  %2649 = vrot.lane.b32.xlu0 %v2514, 126
  %v2650 = vpop.permute.xlu0 %2649
  %2651 = vrot.lane.b32.xlu0 %v2515, 126
  %v2652 = vpop.permute.xlu0 %2651
  %2653 = vrot.lane.b32.xlu0 %v2516, 126
  %v2654 = vpop.permute.xlu0 %2653
  %2655 = vrot.lane.b32.xlu0 %v2517, 126
  %v2656 = vpop.permute.xlu0 %2655
  %2657 = vrot.lane.b32.xlu0 %v2518, 126
  %v2658 = vpop.permute.xlu0 %2657
  %2659 = vrot.lane.b32.xlu0 %v2519, 126
  %v2660 = vpop.permute.xlu0 %2659
  %2661 = vrot.lane.b32.xlu0 %v2520, 126
  %v2662 = vpop.permute.xlu0 %2661
  %2663 = vrot.lane.b32.xlu0 %v2521, 126
  %v2664 = vpop.permute.xlu0 %2663
  %2665 = vrot.lane.b32.xlu0 %v2522, 126
  %v2666 = vpop.permute.xlu0 %2665
  %v2679 = vand.u32 %v2666, %v2541
  %2681 = vmatpush.bf16.msra.mxu0 %v2658
  %2682 = vmatpush.bf16.msra.mxu0 %v2656
  %2683 = vmatpush.bf16.msra.mxu0 %v2654
  %2684 = vmatpush.bf16.msra.mxu0 %v2652
  %2685 = vmatpush.bf16.msra.mxu0 %v2650
  %2686 = vmatpush.bf16.msra.mxu0 %v2648
  %2687 = vmatpush.bf16.msra.mxu0 %v2646
  %2688 = vmatpush.bf16.msra.mxu0 %v2644
  %2689 = vmatmul.bf16.gmra.mxu0 %v2433
  %v2690 = vpop.f32.mrf.mxu0
  %v2691 = vadd.f32 0.0, %v2690
  %v2692 = vpop.f32.mrf.mxu0
  %v2693 = vadd.f32 0.0, %v2692
  %2694 = vdwg.mxu0
  %2695 = vmatpush.bf16.msra.mxu0 0
  %2696 = vmatpush.bf16.msra.mxu0 0
  %2697 = vmatpush.bf16.msra.mxu0 0
  %2698 = vmatpush.bf16.msra.mxu0 0
  %2699 = vmatpush.bf16.msra.mxu0 %v2679
  %2700 = vmatpush.bf16.msra.mxu0 %v2664
  %2701 = vmatpush.bf16.msra.mxu0 %v2662
  %2702 = vmatpush.bf16.msra.mxu0 %v2660
  %2703 = vmatmul.bf16.gmra.mxu0 %v2536
  %v2704 = vpop.f32.mrf.mxu0
  %v2705 = vadd.f32 %v2691, %v2704
  %v2706 = vpop.f32.mrf.mxu0
  %v2707 = vadd.f32 %v2693, %v2706
  %2708 = vdwg.mxu0
  %s2709 = scalar_lea.vmem %s7, 32
  %v2710 = vld [vmem:[%s2709] sm:$0xff]
  %v2711 = vld [vmem:[%s2709 + $0x8] sm:$0xff]
  %v2712 = vld [vmem:[%s2709 + $0x10] sm:$0xff]
  %v2713 = vld [vmem:[%s2709 + $0x18] sm:$0xff]
  %v2715 = vsel %vm2577, %v2710, 0
  %v2718 = vsel %vm2577, %v2711, 0
  %v2721 = vsel %vm2577, %v2712, 0
  %v2724 = vsel %vm2577, %v2713, 0
  %2726 = vmatpush.msra.mxu0 0.0
  %2727 = vmatpush.msra.mxu0 0.0
  %2728 = vmatpush.msra.mxu0 0.0
  %2729 = vmatpush.msra.mxu0 0.0
  %2730 = vmatpush.msra.mxu0 0.0
  %2731 = vmatpush.msra.mxu0 0.0
  %2732 = vmatpush.msra.mxu0 0.0
  %2733 = vmatpush.msra.mxu0 0.0
  %2734 = vmatpush.msra.mxu0 0.0
  %2735 = vmatpush.msra.mxu0 0.0
  %2736 = vmatpush.msra.mxu0 0.0
  %2737 = vmatpush.msra.mxu0 0.0
  %2738 = vmatpush.msra.mxu0 0.0
  %2739 = vmatpush.msra.mxu0 0.0
  %2740 = vmatpush.msra.mxu0 %v2707
  %2741 = vmatpush.msra.mxu0 %v2705
  %2742 = vmatmul.f32.gmra.mxu0 %v2715
  %v2743 = vpop.f32.mrf.mxu0
  %v2744 = vadd.f32 0.0, %v2743
  %2745 = vmatmul.f32.gmra.mxu0 %v2718
  %v2746 = vpop.f32.mrf.mxu0
  %v2747 = vadd.f32 0.0, %v2746
  %2748 = vmatmul.f32.gmra.mxu0 %v2721
  %v2749 = vpop.f32.mrf.mxu0
  %v2750 = vadd.f32 0.0, %v2749
  %2751 = vmatmul.f32.gmra.mxu0 %v2724
  %v2752 = vpop.f32.mrf.mxu0
  %v2753 = vadd.f32 0.0, %v2752
  %2754 = vdwg.mxu0
  %v2755 = vadd.f32 %v2639, %v2744
  %v2756 = vadd.f32 %v2640, %v2747
  %v2757 = vadd.f32 %v2641, %v2750
  %v2758 = vadd.f32 %v2642, %v2753
  %2759 = vrot.lane.b32.xlu0 %v2511, 124
  %v2760 = vpop.permute.xlu0 %2759
  %2761 = vrot.lane.b32.xlu0 %v2512, 124
  %v2762 = vpop.permute.xlu0 %2761
  %2763 = vrot.lane.b32.xlu0 %v2513, 124
  %v2764 = vpop.permute.xlu0 %2763
  %2765 = vrot.lane.b32.xlu0 %v2514, 124
  %v2766 = vpop.permute.xlu0 %2765
  %2767 = vrot.lane.b32.xlu0 %v2515, 124
  %v2768 = vpop.permute.xlu0 %2767
  %2769 = vrot.lane.b32.xlu0 %v2516, 124
  %v2770 = vpop.permute.xlu0 %2769
  %2771 = vrot.lane.b32.xlu0 %v2517, 124
  %v2772 = vpop.permute.xlu0 %2771
  %2773 = vrot.lane.b32.xlu0 %v2518, 124
  %v2774 = vpop.permute.xlu0 %2773
  %2775 = vrot.lane.b32.xlu0 %v2519, 124
  %v2776 = vpop.permute.xlu0 %2775
  %2777 = vrot.lane.b32.xlu0 %v2520, 124
  %v2778 = vpop.permute.xlu0 %2777
  %2779 = vrot.lane.b32.xlu0 %v2521, 124
  %v2780 = vpop.permute.xlu0 %2779
  %2781 = vrot.lane.b32.xlu0 %v2522, 124
  %v2782 = vpop.permute.xlu0 %2781
  %v2795 = vand.u32 %v2782, %v2541
  %2797 = vmatpush.bf16.msra.mxu0 %v2774
  %2798 = vmatpush.bf16.msra.mxu0 %v2772
  %2799 = vmatpush.bf16.msra.mxu0 %v2770
  %2800 = vmatpush.bf16.msra.mxu0 %v2768
  %2801 = vmatpush.bf16.msra.mxu0 %v2766
  %2802 = vmatpush.bf16.msra.mxu0 %v2764
  %2803 = vmatpush.bf16.msra.mxu0 %v2762
  %2804 = vmatpush.bf16.msra.mxu0 %v2760
  %2805 = vmatmul.bf16.gmra.mxu0 %v2433
  %v2806 = vpop.f32.mrf.mxu0
  %v2807 = vadd.f32 0.0, %v2806
  %v2808 = vpop.f32.mrf.mxu0
  %v2809 = vadd.f32 0.0, %v2808
  %2810 = vdwg.mxu0
  %2811 = vmatpush.bf16.msra.mxu0 0
  %2812 = vmatpush.bf16.msra.mxu0 0
  %2813 = vmatpush.bf16.msra.mxu0 0
  %2814 = vmatpush.bf16.msra.mxu0 0
  %2815 = vmatpush.bf16.msra.mxu0 %v2795
  %2816 = vmatpush.bf16.msra.mxu0 %v2780
  %2817 = vmatpush.bf16.msra.mxu0 %v2778
  %2818 = vmatpush.bf16.msra.mxu0 %v2776
  %2819 = vmatmul.bf16.gmra.mxu0 %v2536
  %v2820 = vpop.f32.mrf.mxu0
  %v2821 = vadd.f32 %v2807, %v2820
  %v2822 = vpop.f32.mrf.mxu0
  %v2823 = vadd.f32 %v2809, %v2822
  %2824 = vdwg.mxu0
  %s2825 = scalar_lea.vmem %s7, 64
  %v2826 = vld [vmem:[%s2825] sm:$0xff]
  %v2827 = vld [vmem:[%s2825 + $0x8] sm:$0xff]
  %v2828 = vld [vmem:[%s2825 + $0x10] sm:$0xff]
  %v2829 = vld [vmem:[%s2825 + $0x18] sm:$0xff]
  %v2831 = vsel %vm2577, %v2826, 0
  %v2834 = vsel %vm2577, %v2827, 0
  %v2837 = vsel %vm2577, %v2828, 0
  %v2840 = vsel %vm2577, %v2829, 0
  %2842 = vmatpush.msra.mxu0 0.0
  %2843 = vmatpush.msra.mxu0 0.0
  %2844 = vmatpush.msra.mxu0 0.0
  %2845 = vmatpush.msra.mxu0 0.0
  %2846 = vmatpush.msra.mxu0 0.0
  %2847 = vmatpush.msra.mxu0 0.0
  %2848 = vmatpush.msra.mxu0 0.0
  %2849 = vmatpush.msra.mxu0 0.0
  %2850 = vmatpush.msra.mxu0 0.0
  %2851 = vmatpush.msra.mxu0 0.0
  %2852 = vmatpush.msra.mxu0 0.0
  %2853 = vmatpush.msra.mxu0 0.0
  %2854 = vmatpush.msra.mxu0 0.0
  %2855 = vmatpush.msra.mxu0 0.0
  %2856 = vmatpush.msra.mxu0 %v2823
  %2857 = vmatpush.msra.mxu0 %v2821
  %2858 = vmatmul.f32.gmra.mxu0 %v2831
  %v2859 = vpop.f32.mrf.mxu0
  %v2860 = vadd.f32 0.0, %v2859
  %2861 = vmatmul.f32.gmra.mxu0 %v2834
  %v2862 = vpop.f32.mrf.mxu0
  %v2863 = vadd.f32 0.0, %v2862
  %2864 = vmatmul.f32.gmra.mxu0 %v2837
  %v2865 = vpop.f32.mrf.mxu0
  %v2866 = vadd.f32 0.0, %v2865
  %2867 = vmatmul.f32.gmra.mxu0 %v2840
  %v2868 = vpop.f32.mrf.mxu0
  %v2869 = vadd.f32 0.0, %v2868
  %2870 = vdwg.mxu0
  %v2871 = vadd.f32 %v2755, %v2860
  %v2872 = vadd.f32 %v2756, %v2863
  %v2873 = vadd.f32 %v2757, %v2866
  %v2874 = vadd.f32 %v2758, %v2869
  %2875 = vrot.lane.b32.xlu0 %v2511, 122
  %v2876 = vpop.permute.xlu0 %2875
  %2877 = vrot.lane.b32.xlu0 %v2512, 122
  %v2878 = vpop.permute.xlu0 %2877
  %2879 = vrot.lane.b32.xlu0 %v2513, 122
  %v2880 = vpop.permute.xlu0 %2879
  %2881 = vrot.lane.b32.xlu0 %v2514, 122
  %v2882 = vpop.permute.xlu0 %2881
  %2883 = vrot.lane.b32.xlu0 %v2515, 122
  %v2884 = vpop.permute.xlu0 %2883
  %2885 = vrot.lane.b32.xlu0 %v2516, 122
  %v2886 = vpop.permute.xlu0 %2885
  %2887 = vrot.lane.b32.xlu0 %v2517, 122
  %v2888 = vpop.permute.xlu0 %2887
  %2889 = vrot.lane.b32.xlu0 %v2518, 122
  %v2890 = vpop.permute.xlu0 %2889
  %2891 = vrot.lane.b32.xlu0 %v2519, 122
  %v2892 = vpop.permute.xlu0 %2891
  %2893 = vrot.lane.b32.xlu0 %v2520, 122
  %v2894 = vpop.permute.xlu0 %2893
  %2895 = vrot.lane.b32.xlu0 %v2521, 122
  %v2896 = vpop.permute.xlu0 %2895
  %2897 = vrot.lane.b32.xlu0 %v2522, 122
  %v2898 = vpop.permute.xlu0 %2897
  %v2911 = vand.u32 %v2898, %v2541
  %2913 = vmatpush.bf16.msra.mxu0 %v2890
  %2914 = vmatpush.bf16.msra.mxu0 %v2888
  %2915 = vmatpush.bf16.msra.mxu0 %v2886
  %2916 = vmatpush.bf16.msra.mxu0 %v2884
  %2917 = vmatpush.bf16.msra.mxu0 %v2882
  %2918 = vmatpush.bf16.msra.mxu0 %v2880
  %2919 = vmatpush.bf16.msra.mxu0 %v2878
  %2920 = vmatpush.bf16.msra.mxu0 %v2876
  %2921 = vmatmul.bf16.gmra.mxu0 %v2433
  %v2922 = vpop.f32.mrf.mxu0
  %v2923 = vadd.f32 0.0, %v2922
  %v2924 = vpop.f32.mrf.mxu0
  %v2925 = vadd.f32 0.0, %v2924
  %2926 = vdwg.mxu0
  %2927 = vmatpush.bf16.msra.mxu0 0
  %2928 = vmatpush.bf16.msra.mxu0 0
  %2929 = vmatpush.bf16.msra.mxu0 0
  %2930 = vmatpush.bf16.msra.mxu0 0
  %2931 = vmatpush.bf16.msra.mxu0 %v2911
  %2932 = vmatpush.bf16.msra.mxu0 %v2896
  %2933 = vmatpush.bf16.msra.mxu0 %v2894
  %2934 = vmatpush.bf16.msra.mxu0 %v2892
  %2935 = vmatmul.bf16.gmra.mxu0 %v2536
  %v2936 = vpop.f32.mrf.mxu0
  %v2937 = vadd.f32 %v2923, %v2936
  %v2938 = vpop.f32.mrf.mxu0
  %v2939 = vadd.f32 %v2925, %v2938
  %2940 = vdwg.mxu0
  %s2941 = scalar_lea.vmem %s7, 96
  %v2942 = vld [vmem:[%s2941] sm:$0xff]
  %v2943 = vld [vmem:[%s2941 + $0x8] sm:$0xff]
  %v2944 = vld [vmem:[%s2941 + $0x10] sm:$0xff]
  %v2945 = vld [vmem:[%s2941 + $0x18] sm:$0xff]
  %v2947 = vsel %vm2577, %v2942, 0
  %v2950 = vsel %vm2577, %v2943, 0
  %v2953 = vsel %vm2577, %v2944, 0
  %v2956 = vsel %vm2577, %v2945, 0
  %2958 = vmatpush.msra.mxu0 0.0
  %2959 = vmatpush.msra.mxu0 0.0
  %2960 = vmatpush.msra.mxu0 0.0
  %2961 = vmatpush.msra.mxu0 0.0
  %2962 = vmatpush.msra.mxu0 0.0
  %2963 = vmatpush.msra.mxu0 0.0
  %2964 = vmatpush.msra.mxu0 0.0
  %2965 = vmatpush.msra.mxu0 0.0
  %2966 = vmatpush.msra.mxu0 0.0
  %2967 = vmatpush.msra.mxu0 0.0
  %2968 = vmatpush.msra.mxu0 0.0
  %2969 = vmatpush.msra.mxu0 0.0
  %2970 = vmatpush.msra.mxu0 0.0
  %2971 = vmatpush.msra.mxu0 0.0
  %2972 = vmatpush.msra.mxu0 %v2939
  %2973 = vmatpush.msra.mxu0 %v2937
  %2974 = vmatmul.f32.gmra.mxu0 %v2947
  %v2975 = vpop.f32.mrf.mxu0
  %v2976 = vadd.f32 0.0, %v2975
  %2977 = vmatmul.f32.gmra.mxu0 %v2950
  %v2978 = vpop.f32.mrf.mxu0
  %v2979 = vadd.f32 0.0, %v2978
  %2980 = vmatmul.f32.gmra.mxu0 %v2953
  %v2981 = vpop.f32.mrf.mxu0
  %v2982 = vadd.f32 0.0, %v2981
  %2983 = vmatmul.f32.gmra.mxu0 %v2956
  %v2984 = vpop.f32.mrf.mxu0
  %v2985 = vadd.f32 0.0, %v2984
  %2986 = vdwg.mxu0
  %v2987 = vadd.f32 %v2871, %v2976
  %v2988 = vadd.f32 %v2872, %v2979
  %v2989 = vadd.f32 %v2873, %v2982
  %v2990 = vadd.f32 %v2874, %v2985
  %vm2991 = vcmask 15360
  %2992 = vst.msk [vmem:[%s9] sm:$0xff] %vm2991, %v2987
  %2993 = vst.msk [vmem:[%s9 + $0x8] sm:$0xff] %vm2991, %v2988
  %2994 = vst.msk [vmem:[%s9 + $0x10] sm:$0xff] %vm2991, %v2989
  %2995 = vst.msk [vmem:[%s9 + $0x18] sm:$0xff] %vm2991, %v2990
  // Predicated region
  $region38: #{forward.1} parent=0 // pred_check
    _
  $region39: #{forward.1} parent=0 // pred_check_branch
    %2997 = sbr.rel (0) target = $region41
  $region40: #{forward.1} parent=0 // pred_region
    _
  $region41: #{forward.1} parent=0 // pred_fallthru
    _
  // Predicated region
  $region42: #{forward.1} parent=0 // pred_check
    _
  $region43: #{forward.1} parent=0 // pred_check_branch
    %2999 = sbr.rel (0) target = $region45
  $region44: #{forward.1} parent=0 // pred_region
    _
  $region45: #{forward.1} parent=0 // pred_fallthru
    _

</llo_original>
